<compile_context>
chip_gen: v6e
topology: v6e:2x2x1
jax: 0.10.0
libtpu: 0.0.40
codegen_flags: <defaults>
</compile_context>

<pallas_src>
import functools

import jax
import jax.numpy as jnp
from jax.experimental import pallas as pl
from jax.experimental.pallas import tpu as pltpu

FEAT_DIM = 32     # raw detection feature dim (input to the "field")
EMB_DIM = 128     # embedding dim produced by the field / stored per observation
STAGE_THRESHOLDS = (0.7, 0.3)   # cascade of 2 stages: strict then loose matching
                                # (must be > 0: the packed-argmax key relies on
                                #  eligible similarities being positive floats)


# ----------------------------------------------------------------------------
# Fused kernel: embed field + cosine similarity + 2-stage greedy association
# ----------------------------------------------------------------------------
def _tracker_kernel(obs_cand_ref,           # SMEM (M,)   int32  candidate obs
                    obs_ref,                # VMEM (M, D) f32    stored embeddings
                    feats_ref,              # VMEM (N, F) f32    raw detection feats
                    w_ref, b_ref,           # VMEM (F, D), (1, D)
                    new_emb_ref,            # VMEM (N, D) f32    out: detection emb
                    match_ref,              # SMEM (M,)   int32  out: col or -1
                    taken_ref,              # VMEM (1, N) int32  out: taken detections
                    *, thresholds):
    M = obs_ref.shape[0]
    N = feats_ref.shape[0]
    NP2 = pl.next_power_of_2(N)

    # --- "field": embed new detections (MXU), keep result for the sim dot ---
    new_emb = (jnp.dot(feats_ref[...], w_ref[...],
                       preferred_element_type=jnp.float32) + b_ref[...])
    new_emb_ref[...] = new_emb.astype(new_emb_ref.dtype)

    # --- cosine-similarity matrix, computed ONCE for all cascade stages -----
    # normalization stays in f32 (VPU + EUP rsqrt); only the MXU operands are
    # narrowed to bf16, accumulation is f32 via preferred_element_type.
    obs = obs_ref[...].astype(jnp.float32)
    obs_n = obs * jax.lax.rsqrt(jnp.sum(obs * obs, axis=-1, keepdims=True) + 1e-12)
    new_n = new_emb * jax.lax.rsqrt(
        jnp.sum(new_emb * new_emb, axis=-1, keepdims=True) + 1e-12)
    sim = jax.lax.dot_general(                       # (M, N), no explicit .T
        obs_n.astype(jnp.bfloat16), new_n.astype(jnp.bfloat16),
        dimension_numbers=(((1,), (1,)), ((), ())),
        preferred_element_type=jnp.float32)

    # --- packed sort key, built ONCE for the whole matrix (off the chain) ---
    # bitcast of a positive f32 is monotone; clearing log2(NP2) low mantissa
    # bits and OR-ing in the reversed column index gives a lowest-index
    # tie-break with a single XLU max-reduction per greedy step.
    col_ids = jax.lax.broadcasted_iota(jnp.int32, (1, N), 1)
    rev_ids = (NP2 - 1) - col_ids                    # reversed col idx, low bits
    lowmask = jnp.int32(~(NP2 - 1))
    key_all = jnp.bitwise_or(
        jnp.bitwise_and(pltpu.bitcast(sim, jnp.int32), lowmask), rev_ids)

    taken_or = jnp.zeros((1, N), jnp.int32)          # 0 = free, -1 = taken
    match_vals = [jnp.int32(-1)] * M                 # per-obs matched column
    # "done" rows never match: non-candidate obs or obs matched in an earlier
    # stage (scalar gates read once from SMEM, carried in sregs).
    done = [obs_cand_ref[i] == 0 for i in range(M)]

    # Fully unrolled cascade: stages x rows visible to the LLO scheduler.
    # Stage 2 only sees obs not matched in stage 1 and detections not taken.
    for thr in thresholds:
        # Per-stage threshold eligibility, hoisted off the serial greedy chain
        # (strict `> thr`, matching the reference association semantics).
        key_thr = jnp.where(sim > thr, key_all, jnp.int32(-1))
        for i in range(M):
            # Taken columns are killed with a single OR (0 keeps key, -1 kills);
            # this is the only per-step VPU work on the serial chain.
            key = jnp.bitwise_or(key_thr[i:i + 1, :], taken_or)
            best = jnp.max(key)                                  # single reduce
            matched = jnp.logical_and(best >= 0, jnp.logical_not(done[i]))
            j = (NP2 - 1) - jnp.bitwise_and(best, NP2 - 1)
            match_vals[i] = jnp.where(matched, j, match_vals[i]).astype(jnp.int32)
            done[i] = jnp.logical_or(done[i], matched)
            taken_or = jnp.where(jnp.logical_and(matched, col_ids == j),
                                 jnp.int32(-1), taken_or)

    # Batched result stores at the end (off the serial greedy chain).
    for i in range(M):
        match_ref[i] = match_vals[i]
    taken_ref[...] = jnp.bitwise_and(taken_or, 1)    # -1 -> 1 (taken), 0 -> 0


def tracker_kernel_call(obs_cand, obs_emb, inp_feats, w, b,
                        thresholds=STAGE_THRESHOLDS):
    M = obs_emb.shape[0]
    N = inp_feats.shape[0]
    for t in thresholds:
        assert t > 0.0, "packed-argmax key requires positive thresholds"
    kernel = functools.partial(
        _tracker_kernel, thresholds=tuple(float(t) for t in thresholds))
    # TODO(synk): if M/N grow to realistic tracker sizes, tile obs rows with a
    # grid + BlockSpecs (v7x VMEM is 64 MiB); if batched over frames, add a
    # leading "parallel" grid axis to use v7x's second TensorCore.
    return pl.pallas_call(
        kernel,
        out_shape=(
            jax.ShapeDtypeStruct((N, w.shape[1]), jnp.float32),   # new_emb
            jax.ShapeDtypeStruct((M,), jnp.int32),                # match col / -1
            jax.ShapeDtypeStruct((1, N), jnp.int32),              # taken detections
        ),
        in_specs=[
            pl.BlockSpec(memory_space=pltpu.MemorySpace.SMEM),    # obs_cand
            pl.BlockSpec(memory_space=pltpu.MemorySpace.VMEM),    # obs_emb
            pl.BlockSpec(memory_space=pltpu.MemorySpace.VMEM),    # inp_feats
            pl.BlockSpec(memory_space=pltpu.MemorySpace.VMEM),    # w
            pl.BlockSpec(memory_space=pltpu.MemorySpace.VMEM),    # b
        ],
        out_specs=(
            pl.BlockSpec(memory_space=pltpu.MemorySpace.VMEM),
            pl.BlockSpec(memory_space=pltpu.MemorySpace.SMEM),
            pl.BlockSpec(memory_space=pltpu.MemorySpace.VMEM),
        ),
    )(obs_cand.astype(jnp.int32), obs_emb, inp_feats, w, b)


# ----------------------------------------------------------------------------
# MultiStageTracker.forward (thin glue around the single fused kernel)
# ----------------------------------------------------------------------------
def multi_stage_tracker_forward(obs_active, obs_index, obs_emb, inp_feats, w, b):
    """
    obs_active : (M,)  bool      -- KEY_ACTIVE of current observations
    obs_index  : (M,)  int32     -- KEY_INDEX of current observations (<0 == unmatched)
    obs_emb    : (M, EMB_DIM)    -- stored appearance embeddings of observations
    inp_feats  : (num, FEAT_DIM) -- raw features of the `num` new detections
    Returns: (obs_active_out, obs_index_out), (new_index, new_emb, new_is_unmatched)
    """
    num = inp_feats.shape[0]

    # new = TensorDict({KEY_INDEX: arange(num)})
    new_index = jnp.arange(num, dtype=jnp.int32)

    # obs_candidates = obs[active_mask] (and still unmatched); the cascade of
    # stages runs fully inside the fused kernel.
    obs_cand = obs_active & (obs_index < 0)
    new_emb, match, taken = tracker_kernel_call(obs_cand, obs_emb, inp_feats, w, b)
    # TODO(synk): the original breaks early when either side is empty; the
    # masked fixed-shape formulation makes the extra stage a no-op instead.

    matched = match >= 0
    obs_index_out = jnp.where(matched, match, obs_index)

    # obs[KEY_ACTIVE] = where(obs[KEY_INDEX] < 0, False, True)
    obs_active_out = obs_index_out >= 0

    # detections never taken by any stage remain as new tracklet candidates
    new_unmatched = taken.reshape(num) == 0

    return (obs_active_out, obs_index_out), (new_index, new_emb, new_unmatched)


# ----------------------------------------------------------------------------
if __name__ == "__main__":
    key = jax.random.PRNGKey(0)
    k_obs, k_inp, k_w, k_b = jax.random.split(key, 4)

    M = 8        # number of stored observations
    NUM = 8      # number of new detections

    # Deterministic "parameters" of the embedding field.
    w = jax.random.normal(k_w, (FEAT_DIM, EMB_DIM), jnp.float32) * 0.1
    b = jax.random.normal(k_b, (1, EMB_DIM), jnp.float32) * 0.01

    # Current tracker state (obs).
    obs_emb = jax.random.normal(k_obs, (M, EMB_DIM), jnp.float32)
    obs_index = jnp.full((M,), -1, jnp.int32)
    obs_active = jnp.array([1, 1, 1, 1, 1, 1, 0, 0], dtype=bool)

    # Next-frame detections (inp).
    inp_feats = jax.random.normal(k_inp, (NUM, FEAT_DIM), jnp.float32)

    (obs_active_out, obs_index_out), (new_index, new_emb, new_unmatched) = (
        multi_stage_tracker_forward(obs_active, obs_index, obs_emb, inp_feats, w, b)
    )
    jax.block_until_ready(
        (obs_active_out, obs_index_out, new_index, new_emb, new_unmatched))
    print("KERNEL_OK")
</pallas_src>

<mosaic_0001>
module attributes {stable_mosaic.version = 11 : i64} {
  func.func @_tracker_kernel(%arg0: memref<8xi32, #tpu.memory_space<smem>>, %arg1: memref<8x128xf32, #tpu.memory_space<vmem>>, %arg2: memref<8x32xf32, #tpu.memory_space<vmem>>, %arg3: memref<32x128xf32, #tpu.memory_space<vmem>>, %arg4: memref<1x128xf32, #tpu.memory_space<vmem>>, %arg5: memref<8x128xf32, #tpu.memory_space<vmem>>, %arg6: memref<8xi32, #tpu.memory_space<smem>>, %arg7: memref<1x8xi32, #tpu.memory_space<vmem>>) attributes {dimension_semantics = [], scalar_prefetch = 0 : i64, scratch_operands = 0 : i64, tpu.core_type = #tpu.core_type<tc>} {
    %c0 = arith.constant 0 : index
    %c0_0 = arith.constant 0 : index
    %0 = vector.load %arg2[%c0, %c0_0] : memref<8x32xf32, #tpu.memory_space<vmem>>, vector<8x32xf32>
    %c0_1 = arith.constant 0 : index
    %c0_2 = arith.constant 0 : index
    %1 = vector.load %arg3[%c0_1, %c0_2] : memref<32x128xf32, #tpu.memory_space<vmem>>, vector<32x128xf32>
    %cst = arith.constant dense<0.000000e+00> : vector<8x128xf32>
    %2 = tpu.matmul %0, %1, %cst {dimension_numbers = #tpu.dot_dimension_numbers<[1], [0], [0], [1], [0, 0, 1, 1], [], []>} : vector<8x32xf32>, vector<32x128xf32>, vector<8x128xf32> -> vector<8x128xf32>
    %c0_3 = arith.constant 0 : index
    %c0_4 = arith.constant 0 : index
    %3 = vector.load %arg4[%c0_3, %c0_4] : memref<1x128xf32, #tpu.memory_space<vmem>>, vector<1x128xf32>
    %4 = vector.broadcast %3 : vector<1x128xf32> to vector<8x128xf32>
    %5 = arith.addf %2, %4 : vector<8x128xf32>
    %c0_5 = arith.constant 0 : index
    %c0_6 = arith.constant 0 : index
    %6 = vector.load %arg5[%c0_5, %c0_6] : memref<8x128xf32, #tpu.memory_space<vmem>>, vector<8x128xf32>
    tpu.vector_store %arg5[%c0_5, %c0_6], %5 {strides = array<i32>} : memref<8x128xf32, #tpu.memory_space<vmem>>, vector<8x128xf32>,
    %c0_7 = arith.constant 0 : index
    %c0_8 = arith.constant 0 : index
    %7 = vector.load %arg1[%c0_7, %c0_8] : memref<8x128xf32, #tpu.memory_space<vmem>>, vector<8x128xf32>
    %8 = arith.mulf %7, %7 : vector<8x128xf32>
    %cst_9 = arith.constant dense<0.000000e+00> : vector<8xf32>
    %9 = vector.multi_reduction <add>, %8, %cst_9 [1] : vector<8x128xf32> to vector<8xf32>
    %10 = vector.shape_cast %9 : vector<8xf32> to vector<8x1xf32>
    %cst_10 = arith.constant 9.99999996E-13 : f32
    %11 = vector.broadcast %cst_10 : f32 to vector<8x1xf32>
    %12 = arith.addf %10, %11 : vector<8x1xf32>
    %13 = math.rsqrt %12 : vector<8x1xf32>
    %14 = vector.broadcast %13 : vector<8x1xf32> to vector<8x128xf32>
    %15 = arith.mulf %7, %14 : vector<8x128xf32>
    %16 = arith.mulf %5, %5 : vector<8x128xf32>
    %cst_11 = arith.constant dense<0.000000e+00> : vector<8xf32>
    %17 = vector.multi_reduction <add>, %16, %cst_11 [1] : vector<8x128xf32> to vector<8xf32>
    %18 = vector.shape_cast %17 : vector<8xf32> to vector<8x1xf32>
    %cst_12 = arith.constant 9.99999996E-13 : f32
    %19 = vector.broadcast %cst_12 : f32 to vector<8x1xf32>
    %20 = arith.addf %18, %19 : vector<8x1xf32>
    %21 = math.rsqrt %20 : vector<8x1xf32>
    %22 = vector.broadcast %21 : vector<8x1xf32> to vector<8x128xf32>
    %23 = arith.mulf %5, %22 : vector<8x128xf32>
    %24 = arith.truncf %15 : vector<8x128xf32> to vector<8x128xbf16>
    %25 = arith.truncf %23 : vector<8x128xf32> to vector<8x128xbf16>
    %cst_13 = arith.constant dense<0.000000e+00> : vector<8x8xf32>
    %26 = tpu.matmul %24, %25, %cst_13 {dimension_numbers = #tpu.dot_dimension_numbers<[1], [1], [0], [0], [0, 0, 1, 0], [], []>} : vector<8x128xbf16>, vector<8x128xbf16>, vector<8x8xf32> -> vector<8x8xf32>
    %27 = tpu.iota {dimensions = array<i32: 1>} : vector<1x8xi32>
    %c7_i32 = arith.constant 7 : i32
    %28 = vector.broadcast %c7_i32 : i32 to vector<1x8xi32>
    %29 = arith.subi %28, %27 : vector<1x8xi32>
    %30 = tpu.bitcast %26 : vector<8x8xf32> -> vector<8x8xi32>
    %c-8_i32 = arith.constant -8 : i32
    %31 = vector.broadcast %c-8_i32 : i32 to vector<8x8xi32>
    %32 = arith.andi %30, %31 : vector<8x8xi32>
    %33 = vector.broadcast %29 : vector<1x8xi32> to vector<8x8xi32>
    %34 = arith.ori %32, %33 : vector<8x8xi32>
    %c0_i32 = arith.constant 0 : i32
    %35 = vector.broadcast %c0_i32 : i32 to vector<1x8xi32>
    %c0_14 = arith.constant 0 : index
    %36 = memref.load %arg0[%c0_14] : memref<8xi32, #tpu.memory_space<smem>>
    %c0_i32_15 = arith.constant 0 : i32
    %37 = arith.cmpi eq, %36, %c0_i32_15 : i32
    %c1 = arith.constant 1 : index
    %38 = memref.load %arg0[%c1] : memref<8xi32, #tpu.memory_space<smem>>
    %c0_i32_16 = arith.constant 0 : i32
    %39 = arith.cmpi eq, %38, %c0_i32_16 : i32
    %c2 = arith.constant 2 : index
    %40 = memref.load %arg0[%c2] : memref<8xi32, #tpu.memory_space<smem>>
    %c0_i32_17 = arith.constant 0 : i32
    %41 = arith.cmpi eq, %40, %c0_i32_17 : i32
    %c3 = arith.constant 3 : index
    %42 = memref.load %arg0[%c3] : memref<8xi32, #tpu.memory_space<smem>>
    %c0_i32_18 = arith.constant 0 : i32
    %43 = arith.cmpi eq, %42, %c0_i32_18 : i32
    %c4 = arith.constant 4 : index
    %44 = memref.load %arg0[%c4] : memref<8xi32, #tpu.memory_space<smem>>
    %c0_i32_19 = arith.constant 0 : i32
    %45 = arith.cmpi eq, %44, %c0_i32_19 : i32
    %c5 = arith.constant 5 : index
    %46 = memref.load %arg0[%c5] : memref<8xi32, #tpu.memory_space<smem>>
    %c0_i32_20 = arith.constant 0 : i32
    %47 = arith.cmpi eq, %46, %c0_i32_20 : i32
    %c6 = arith.constant 6 : index
    %48 = memref.load %arg0[%c6] : memref<8xi32, #tpu.memory_space<smem>>
    %c0_i32_21 = arith.constant 0 : i32
    %49 = arith.cmpi eq, %48, %c0_i32_21 : i32
    %c7 = arith.constant 7 : index
    %50 = memref.load %arg0[%c7] : memref<8xi32, #tpu.memory_space<smem>>
    %c0_i32_22 = arith.constant 0 : i32
    %51 = arith.cmpi eq, %50, %c0_i32_22 : i32
    %cst_23 = arith.constant 0.699999988 : f32
    %52 = vector.broadcast %cst_23 : f32 to vector<8x8xf32>
    %53 = arith.cmpf ogt, %26, %52 : vector<8x8xf32>
    %c-1_i32 = arith.constant -1 : i32
    %54 = vector.broadcast %c-1_i32 : i32 to vector<8x8xi32>
    %55 = arith.select %53, %34, %54 : vector<8x8xi1>, vector<8x8xi32>
    %56 = vector.extract_strided_slice %55 {offsets = [0, 0], sizes = [1, 8], strides = [1, 1]} : vector<8x8xi32> to vector<1x8xi32>
    %57 = arith.ori %56, %35 : vector<1x8xi32>
    %58 = vector.shape_cast %57 : vector<1x8xi32> to vector<1x1x8xi32>
    %cst_24 = arith.constant dense<-2147483648> : vector<1xi32>
    %59 = vector.multi_reduction <maxsi>, %58, %cst_24 [1, 2] : vector<1x1x8xi32> to vector<1xi32>
    %60 = vector.shape_cast %59 : vector<1xi32> to vector<1x1x1xi32>
    %61 = vector.extract %60[0, 0, 0] : i32 from vector<1x1x1xi32>
    %c0_i32_25 = arith.constant 0 : i32
    %62 = arith.cmpi sge, %61, %c0_i32_25 : i32
    %true = arith.constant true
    %63 = arith.xori %37, %true : i1
    %64 = arith.andi %62, %63 : i1
    %c7_i32_26 = arith.constant 7 : i32
    %65 = arith.andi %61, %c7_i32_26 : i32
    %c7_i32_27 = arith.constant 7 : i32
    %66 = arith.subi %c7_i32_27, %65 : i32
    %c-1_i32_28 = arith.constant -1 : i32
    %67 = arith.select %64, %66, %c-1_i32_28 : i32
    %68 = arith.ori %37, %64 : i1
    %69 = vector.broadcast %66 : i32 to vector<1x8xi32>
    %70 = arith.cmpi eq, %27, %69 : vector<1x8xi32>
    %71 = vector.broadcast %64 : i1 to vector<1x8xi1>
    %72 = arith.andi %71, %70 : vector<1x8xi1>
    %c-1_i32_29 = arith.constant -1 : i32
    %73 = vector.broadcast %c-1_i32_29 : i32 to vector<1x8xi32>
    %74 = arith.select %72, %73, %35 : vector<1x8xi1>, vector<1x8xi32>
    %75 = vector.extract_strided_slice %55 {offsets = [1, 0], sizes = [1, 8], strides = [1, 1]} : vector<8x8xi32> to vector<1x8xi32>
    %76 = arith.ori %75, %74 : vector<1x8xi32>
    %77 = vector.shape_cast %76 : vector<1x8xi32> to vector<1x1x8xi32>
    %cst_30 = arith.constant dense<-2147483648> : vector<1xi32>
    %78 = vector.multi_reduction <maxsi>, %77, %cst_30 [1, 2] : vector<1x1x8xi32> to vector<1xi32>
    %79 = vector.shape_cast %78 : vector<1xi32> to vector<1x1x1xi32>
    %80 = vector.extract %79[0, 0, 0] : i32 from vector<1x1x1xi32>
    %c0_i32_31 = arith.constant 0 : i32
    %81 = arith.cmpi sge, %80, %c0_i32_31 : i32
    %true_32 = arith.constant true
    %82 = arith.xori %39, %true_32 : i1
    %83 = arith.andi %81, %82 : i1
    %c7_i32_33 = arith.constant 7 : i32
    %84 = arith.andi %80, %c7_i32_33 : i32
    %c7_i32_34 = arith.constant 7 : i32
    %85 = arith.subi %c7_i32_34, %84 : i32
    %c-1_i32_35 = arith.constant -1 : i32
    %86 = arith.select %83, %85, %c-1_i32_35 : i32
    %87 = arith.ori %39, %83 : i1
    %88 = vector.broadcast %85 : i32 to vector<1x8xi32>
    %89 = arith.cmpi eq, %27, %88 : vector<1x8xi32>
    %90 = vector.broadcast %83 : i1 to vector<1x8xi1>
    %91 = arith.andi %90, %89 : vector<1x8xi1>
    %c-1_i32_36 = arith.constant -1 : i32
    %92 = vector.broadcast %c-1_i32_36 : i32 to vector<1x8xi32>
    %93 = arith.select %91, %92, %74 : vector<1x8xi1>, vector<1x8xi32>
    %94 = vector.extract_strided_slice %55 {offsets = [2, 0], sizes = [1, 8], strides = [1, 1]} : vector<8x8xi32> to vector<1x8xi32>
    %95 = arith.ori %94, %93 : vector<1x8xi32>
    %96 = vector.shape_cast %95 : vector<1x8xi32> to vector<1x1x8xi32>
    %cst_37 = arith.constant dense<-2147483648> : vector<1xi32>
    %97 = vector.multi_reduction <maxsi>, %96, %cst_37 [1, 2] : vector<1x1x8xi32> to vector<1xi32>
    %98 = vector.shape_cast %97 : vector<1xi32> to vector<1x1x1xi32>
    %99 = vector.extract %98[0, 0, 0] : i32 from vector<1x1x1xi32>
    %c0_i32_38 = arith.constant 0 : i32
    %100 = arith.cmpi sge, %99, %c0_i32_38 : i32
    %true_39 = arith.constant true
    %101 = arith.xori %41, %true_39 : i1
    %102 = arith.andi %100, %101 : i1
    %c7_i32_40 = arith.constant 7 : i32
    %103 = arith.andi %99, %c7_i32_40 : i32
    %c7_i32_41 = arith.constant 7 : i32
    %104 = arith.subi %c7_i32_41, %103 : i32
    %c-1_i32_42 = arith.constant -1 : i32
    %105 = arith.select %102, %104, %c-1_i32_42 : i32
    %106 = arith.ori %41, %102 : i1
    %107 = vector.broadcast %104 : i32 to vector<1x8xi32>
    %108 = arith.cmpi eq, %27, %107 : vector<1x8xi32>
    %109 = vector.broadcast %102 : i1 to vector<1x8xi1>
    %110 = arith.andi %109, %108 : vector<1x8xi1>
    %c-1_i32_43 = arith.constant -1 : i32
    %111 = vector.broadcast %c-1_i32_43 : i32 to vector<1x8xi32>
    %112 = arith.select %110, %111, %93 : vector<1x8xi1>, vector<1x8xi32>
    %113 = vector.extract_strided_slice %55 {offsets = [3, 0], sizes = [1, 8], strides = [1, 1]} : vector<8x8xi32> to vector<1x8xi32>
    %114 = arith.ori %113, %112 : vector<1x8xi32>
    %115 = vector.shape_cast %114 : vector<1x8xi32> to vector<1x1x8xi32>
    %cst_44 = arith.constant dense<-2147483648> : vector<1xi32>
    %116 = vector.multi_reduction <maxsi>, %115, %cst_44 [1, 2] : vector<1x1x8xi32> to vector<1xi32>
    %117 = vector.shape_cast %116 : vector<1xi32> to vector<1x1x1xi32>
    %118 = vector.extract %117[0, 0, 0] : i32 from vector<1x1x1xi32>
    %c0_i32_45 = arith.constant 0 : i32
    %119 = arith.cmpi sge, %118, %c0_i32_45 : i32
    %true_46 = arith.constant true
    %120 = arith.xori %43, %true_46 : i1
    %121 = arith.andi %119, %120 : i1
    %c7_i32_47 = arith.constant 7 : i32
    %122 = arith.andi %118, %c7_i32_47 : i32
    %c7_i32_48 = arith.constant 7 : i32
    %123 = arith.subi %c7_i32_48, %122 : i32
    %c-1_i32_49 = arith.constant -1 : i32
    %124 = arith.select %121, %123, %c-1_i32_49 : i32
    %125 = arith.ori %43, %121 : i1
    %126 = vector.broadcast %123 : i32 to vector<1x8xi32>
    %127 = arith.cmpi eq, %27, %126 : vector<1x8xi32>
    %128 = vector.broadcast %121 : i1 to vector<1x8xi1>
    %129 = arith.andi %128, %127 : vector<1x8xi1>
    %c-1_i32_50 = arith.constant -1 : i32
    %130 = vector.broadcast %c-1_i32_50 : i32 to vector<1x8xi32>
    %131 = arith.select %129, %130, %112 : vector<1x8xi1>, vector<1x8xi32>
    %132 = vector.extract_strided_slice %55 {offsets = [4, 0], sizes = [1, 8], strides = [1, 1]} : vector<8x8xi32> to vector<1x8xi32>
    %133 = arith.ori %132, %131 : vector<1x8xi32>
    %134 = vector.shape_cast %133 : vector<1x8xi32> to vector<1x1x8xi32>
    %cst_51 = arith.constant dense<-2147483648> : vector<1xi32>
    %135 = vector.multi_reduction <maxsi>, %134, %cst_51 [1, 2] : vector<1x1x8xi32> to vector<1xi32>
    %136 = vector.shape_cast %135 : vector<1xi32> to vector<1x1x1xi32>
    %137 = vector.extract %136[0, 0, 0] : i32 from vector<1x1x1xi32>
    %c0_i32_52 = arith.constant 0 : i32
    %138 = arith.cmpi sge, %137, %c0_i32_52 : i32
    %true_53 = arith.constant true
    %139 = arith.xori %45, %true_53 : i1
    %140 = arith.andi %138, %139 : i1
    %c7_i32_54 = arith.constant 7 : i32
    %141 = arith.andi %137, %c7_i32_54 : i32
    %c7_i32_55 = arith.constant 7 : i32
    %142 = arith.subi %c7_i32_55, %141 : i32
    %c-1_i32_56 = arith.constant -1 : i32
    %143 = arith.select %140, %142, %c-1_i32_56 : i32
    %144 = arith.ori %45, %140 : i1
    %145 = vector.broadcast %142 : i32 to vector<1x8xi32>
    %146 = arith.cmpi eq, %27, %145 : vector<1x8xi32>
    %147 = vector.broadcast %140 : i1 to vector<1x8xi1>
    %148 = arith.andi %147, %146 : vector<1x8xi1>
    %c-1_i32_57 = arith.constant -1 : i32
    %149 = vector.broadcast %c-1_i32_57 : i32 to vector<1x8xi32>
    %150 = arith.select %148, %149, %131 : vector<1x8xi1>, vector<1x8xi32>
    %151 = vector.extract_strided_slice %55 {offsets = [5, 0], sizes = [1, 8], strides = [1, 1]} : vector<8x8xi32> to vector<1x8xi32>
    %152 = arith.ori %151, %150 : vector<1x8xi32>
    %153 = vector.shape_cast %152 : vector<1x8xi32> to vector<1x1x8xi32>
    %cst_58 = arith.constant dense<-2147483648> : vector<1xi32>
    %154 = vector.multi_reduction <maxsi>, %153, %cst_58 [1, 2] : vector<1x1x8xi32> to vector<1xi32>
    %155 = vector.shape_cast %154 : vector<1xi32> to vector<1x1x1xi32>
    %156 = vector.extract %155[0, 0, 0] : i32 from vector<1x1x1xi32>
    %c0_i32_59 = arith.constant 0 : i32
    %157 = arith.cmpi sge, %156, %c0_i32_59 : i32
    %true_60 = arith.constant true
    %158 = arith.xori %47, %true_60 : i1
    %159 = arith.andi %157, %158 : i1
    %c7_i32_61 = arith.constant 7 : i32
    %160 = arith.andi %156, %c7_i32_61 : i32
    %c7_i32_62 = arith.constant 7 : i32
    %161 = arith.subi %c7_i32_62, %160 : i32
    %c-1_i32_63 = arith.constant -1 : i32
    %162 = arith.select %159, %161, %c-1_i32_63 : i32
    %163 = arith.ori %47, %159 : i1
    %164 = vector.broadcast %161 : i32 to vector<1x8xi32>
    %165 = arith.cmpi eq, %27, %164 : vector<1x8xi32>
    %166 = vector.broadcast %159 : i1 to vector<1x8xi1>
    %167 = arith.andi %166, %165 : vector<1x8xi1>
    %c-1_i32_64 = arith.constant -1 : i32
    %168 = vector.broadcast %c-1_i32_64 : i32 to vector<1x8xi32>
    %169 = arith.select %167, %168, %150 : vector<1x8xi1>, vector<1x8xi32>
    %170 = vector.extract_strided_slice %55 {offsets = [6, 0], sizes = [1, 8], strides = [1, 1]} : vector<8x8xi32> to vector<1x8xi32>
    %171 = arith.ori %170, %169 : vector<1x8xi32>
    %172 = vector.shape_cast %171 : vector<1x8xi32> to vector<1x1x8xi32>
    %cst_65 = arith.constant dense<-2147483648> : vector<1xi32>
    %173 = vector.multi_reduction <maxsi>, %172, %cst_65 [1, 2] : vector<1x1x8xi32> to vector<1xi32>
    %174 = vector.shape_cast %173 : vector<1xi32> to vector<1x1x1xi32>
    %175 = vector.extract %174[0, 0, 0] : i32 from vector<1x1x1xi32>
    %c0_i32_66 = arith.constant 0 : i32
    %176 = arith.cmpi sge, %175, %c0_i32_66 : i32
    %true_67 = arith.constant true
    %177 = arith.xori %49, %true_67 : i1
    %178 = arith.andi %176, %177 : i1
    %c7_i32_68 = arith.constant 7 : i32
    %179 = arith.andi %175, %c7_i32_68 : i32
    %c7_i32_69 = arith.constant 7 : i32
    %180 = arith.subi %c7_i32_69, %179 : i32
    %c-1_i32_70 = arith.constant -1 : i32
    %181 = arith.select %178, %180, %c-1_i32_70 : i32
    %182 = arith.ori %49, %178 : i1
    %183 = vector.broadcast %180 : i32 to vector<1x8xi32>
    %184 = arith.cmpi eq, %27, %183 : vector<1x8xi32>
    %185 = vector.broadcast %178 : i1 to vector<1x8xi1>
    %186 = arith.andi %185, %184 : vector<1x8xi1>
    %c-1_i32_71 = arith.constant -1 : i32
    %187 = vector.broadcast %c-1_i32_71 : i32 to vector<1x8xi32>
    %188 = arith.select %186, %187, %169 : vector<1x8xi1>, vector<1x8xi32>
    %189 = vector.extract_strided_slice %55 {offsets = [7, 0], sizes = [1, 8], strides = [1, 1]} : vector<8x8xi32> to vector<1x8xi32>
    %190 = arith.ori %189, %188 : vector<1x8xi32>
    %191 = vector.shape_cast %190 : vector<1x8xi32> to vector<1x1x8xi32>
    %cst_72 = arith.constant dense<-2147483648> : vector<1xi32>
    %192 = vector.multi_reduction <maxsi>, %191, %cst_72 [1, 2] : vector<1x1x8xi32> to vector<1xi32>
    %193 = vector.shape_cast %192 : vector<1xi32> to vector<1x1x1xi32>
    %194 = vector.extract %193[0, 0, 0] : i32 from vector<1x1x1xi32>
    %c0_i32_73 = arith.constant 0 : i32
    %195 = arith.cmpi sge, %194, %c0_i32_73 : i32
    %true_74 = arith.constant true
    %196 = arith.xori %51, %true_74 : i1
    %197 = arith.andi %195, %196 : i1
    %c7_i32_75 = arith.constant 7 : i32
    %198 = arith.andi %194, %c7_i32_75 : i32
    %c7_i32_76 = arith.constant 7 : i32
    %199 = arith.subi %c7_i32_76, %198 : i32
    %c-1_i32_77 = arith.constant -1 : i32
    %200 = arith.select %197, %199, %c-1_i32_77 : i32
    %201 = arith.ori %51, %197 : i1
    %202 = vector.broadcast %199 : i32 to vector<1x8xi32>
    %203 = arith.cmpi eq, %27, %202 : vector<1x8xi32>
    %204 = vector.broadcast %197 : i1 to vector<1x8xi1>
    %205 = arith.andi %204, %203 : vector<1x8xi1>
    %c-1_i32_78 = arith.constant -1 : i32
    %206 = vector.broadcast %c-1_i32_78 : i32 to vector<1x8xi32>
    %207 = arith.select %205, %206, %188 : vector<1x8xi1>, vector<1x8xi32>
    %cst_79 = arith.constant 3.000000e-01 : f32
    %208 = vector.broadcast %cst_79 : f32 to vector<8x8xf32>
    %209 = arith.cmpf ogt, %26, %208 : vector<8x8xf32>
    %c-1_i32_80 = arith.constant -1 : i32
    %210 = vector.broadcast %c-1_i32_80 : i32 to vector<8x8xi32>
    %211 = arith.select %209, %34, %210 : vector<8x8xi1>, vector<8x8xi32>
    %212 = vector.extract_strided_slice %211 {offsets = [0, 0], sizes = [1, 8], strides = [1, 1]} : vector<8x8xi32> to vector<1x8xi32>
    %213 = arith.ori %212, %207 : vector<1x8xi32>
    %214 = vector.shape_cast %213 : vector<1x8xi32> to vector<1x1x8xi32>
    %cst_81 = arith.constant dense<-2147483648> : vector<1xi32>
    %215 = vector.multi_reduction <maxsi>, %214, %cst_81 [1, 2] : vector<1x1x8xi32> to vector<1xi32>
    %216 = vector.shape_cast %215 : vector<1xi32> to vector<1x1x1xi32>
    %217 = vector.extract %216[0, 0, 0] : i32 from vector<1x1x1xi32>
    %c0_i32_82 = arith.constant 0 : i32
    %218 = arith.cmpi sge, %217, %c0_i32_82 : i32
    %true_83 = arith.constant true
    %219 = arith.xori %68, %true_83 : i1
    %220 = arith.andi %218, %219 : i1
    %c7_i32_84 = arith.constant 7 : i32
    %221 = arith.andi %217, %c7_i32_84 : i32
    %c7_i32_85 = arith.constant 7 : i32
    %222 = arith.subi %c7_i32_85, %221 : i32
    %223 = arith.select %220, %222, %67 : i32
    %224 = vector.broadcast %222 : i32 to vector<1x8xi32>
    %225 = arith.cmpi eq, %27, %224 : vector<1x8xi32>
    %226 = vector.broadcast %220 : i1 to vector<1x8xi1>
    %227 = arith.andi %226, %225 : vector<1x8xi1>
    %c-1_i32_86 = arith.constant -1 : i32
    %228 = vector.broadcast %c-1_i32_86 : i32 to vector<1x8xi32>
    %229 = arith.select %227, %228, %207 : vector<1x8xi1>, vector<1x8xi32>
    %230 = vector.extract_strided_slice %211 {offsets = [1, 0], sizes = [1, 8], strides = [1, 1]} : vector<8x8xi32> to vector<1x8xi32>
    %231 = arith.ori %230, %229 : vector<1x8xi32>
    %232 = vector.shape_cast %231 : vector<1x8xi32> to vector<1x1x8xi32>
    %cst_87 = arith.constant dense<-2147483648> : vector<1xi32>
    %233 = vector.multi_reduction <maxsi>, %232, %cst_87 [1, 2] : vector<1x1x8xi32> to vector<1xi32>
    %234 = vector.shape_cast %233 : vector<1xi32> to vector<1x1x1xi32>
    %235 = vector.extract %234[0, 0, 0] : i32 from vector<1x1x1xi32>
    %c0_i32_88 = arith.constant 0 : i32
    %236 = arith.cmpi sge, %235, %c0_i32_88 : i32
    %true_89 = arith.constant true
    %237 = arith.xori %87, %true_89 : i1
    %238 = arith.andi %236, %237 : i1
    %c7_i32_90 = arith.constant 7 : i32
    %239 = arith.andi %235, %c7_i32_90 : i32
    %c7_i32_91 = arith.constant 7 : i32
    %240 = arith.subi %c7_i32_91, %239 : i32
    %241 = arith.select %238, %240, %86 : i32
    %242 = vector.broadcast %240 : i32 to vector<1x8xi32>
    %243 = arith.cmpi eq, %27, %242 : vector<1x8xi32>
    %244 = vector.broadcast %238 : i1 to vector<1x8xi1>
    %245 = arith.andi %244, %243 : vector<1x8xi1>
    %c-1_i32_92 = arith.constant -1 : i32
    %246 = vector.broadcast %c-1_i32_92 : i32 to vector<1x8xi32>
    %247 = arith.select %245, %246, %229 : vector<1x8xi1>, vector<1x8xi32>
    %248 = vector.extract_strided_slice %211 {offsets = [2, 0], sizes = [1, 8], strides = [1, 1]} : vector<8x8xi32> to vector<1x8xi32>
    %249 = arith.ori %248, %247 : vector<1x8xi32>
    %250 = vector.shape_cast %249 : vector<1x8xi32> to vector<1x1x8xi32>
    %cst_93 = arith.constant dense<-2147483648> : vector<1xi32>
    %251 = vector.multi_reduction <maxsi>, %250, %cst_93 [1, 2] : vector<1x1x8xi32> to vector<1xi32>
    %252 = vector.shape_cast %251 : vector<1xi32> to vector<1x1x1xi32>
    %253 = vector.extract %252[0, 0, 0] : i32 from vector<1x1x1xi32>
    %c0_i32_94 = arith.constant 0 : i32
    %254 = arith.cmpi sge, %253, %c0_i32_94 : i32
    %true_95 = arith.constant true
    %255 = arith.xori %106, %true_95 : i1
    %256 = arith.andi %254, %255 : i1
    %c7_i32_96 = arith.constant 7 : i32
    %257 = arith.andi %253, %c7_i32_96 : i32
    %c7_i32_97 = arith.constant 7 : i32
    %258 = arith.subi %c7_i32_97, %257 : i32
    %259 = arith.select %256, %258, %105 : i32
    %260 = vector.broadcast %258 : i32 to vector<1x8xi32>
    %261 = arith.cmpi eq, %27, %260 : vector<1x8xi32>
    %262 = vector.broadcast %256 : i1 to vector<1x8xi1>
    %263 = arith.andi %262, %261 : vector<1x8xi1>
    %c-1_i32_98 = arith.constant -1 : i32
    %264 = vector.broadcast %c-1_i32_98 : i32 to vector<1x8xi32>
    %265 = arith.select %263, %264, %247 : vector<1x8xi1>, vector<1x8xi32>
    %266 = vector.extract_strided_slice %211 {offsets = [3, 0], sizes = [1, 8], strides = [1, 1]} : vector<8x8xi32> to vector<1x8xi32>
    %267 = arith.ori %266, %265 : vector<1x8xi32>
    %268 = vector.shape_cast %267 : vector<1x8xi32> to vector<1x1x8xi32>
    %cst_99 = arith.constant dense<-2147483648> : vector<1xi32>
    %269 = vector.multi_reduction <maxsi>, %268, %cst_99 [1, 2] : vector<1x1x8xi32> to vector<1xi32>
    %270 = vector.shape_cast %269 : vector<1xi32> to vector<1x1x1xi32>
    %271 = vector.extract %270[0, 0, 0] : i32 from vector<1x1x1xi32>
    %c0_i32_100 = arith.constant 0 : i32
    %272 = arith.cmpi sge, %271, %c0_i32_100 : i32
    %true_101 = arith.constant true
    %273 = arith.xori %125, %true_101 : i1
    %274 = arith.andi %272, %273 : i1
    %c7_i32_102 = arith.constant 7 : i32
    %275 = arith.andi %271, %c7_i32_102 : i32
    %c7_i32_103 = arith.constant 7 : i32
    %276 = arith.subi %c7_i32_103, %275 : i32
    %277 = arith.select %274, %276, %124 : i32
    %278 = vector.broadcast %276 : i32 to vector<1x8xi32>
    %279 = arith.cmpi eq, %27, %278 : vector<1x8xi32>
    %280 = vector.broadcast %274 : i1 to vector<1x8xi1>
    %281 = arith.andi %280, %279 : vector<1x8xi1>
    %c-1_i32_104 = arith.constant -1 : i32
    %282 = vector.broadcast %c-1_i32_104 : i32 to vector<1x8xi32>
    %283 = arith.select %281, %282, %265 : vector<1x8xi1>, vector<1x8xi32>
    %284 = vector.extract_strided_slice %211 {offsets = [4, 0], sizes = [1, 8], strides = [1, 1]} : vector<8x8xi32> to vector<1x8xi32>
    %285 = arith.ori %284, %283 : vector<1x8xi32>
    %286 = vector.shape_cast %285 : vector<1x8xi32> to vector<1x1x8xi32>
    %cst_105 = arith.constant dense<-2147483648> : vector<1xi32>
    %287 = vector.multi_reduction <maxsi>, %286, %cst_105 [1, 2] : vector<1x1x8xi32> to vector<1xi32>
    %288 = vector.shape_cast %287 : vector<1xi32> to vector<1x1x1xi32>
    %289 = vector.extract %288[0, 0, 0] : i32 from vector<1x1x1xi32>
    %c0_i32_106 = arith.constant 0 : i32
    %290 = arith.cmpi sge, %289, %c0_i32_106 : i32
    %true_107 = arith.constant true
    %291 = arith.xori %144, %true_107 : i1
    %292 = arith.andi %290, %291 : i1
    %c7_i32_108 = arith.constant 7 : i32
    %293 = arith.andi %289, %c7_i32_108 : i32
    %c7_i32_109 = arith.constant 7 : i32
    %294 = arith.subi %c7_i32_109, %293 : i32
    %295 = arith.select %292, %294, %143 : i32
    %296 = vector.broadcast %294 : i32 to vector<1x8xi32>
    %297 = arith.cmpi eq, %27, %296 : vector<1x8xi32>
    %298 = vector.broadcast %292 : i1 to vector<1x8xi1>
    %299 = arith.andi %298, %297 : vector<1x8xi1>
    %c-1_i32_110 = arith.constant -1 : i32
    %300 = vector.broadcast %c-1_i32_110 : i32 to vector<1x8xi32>
    %301 = arith.select %299, %300, %283 : vector<1x8xi1>, vector<1x8xi32>
    %302 = vector.extract_strided_slice %211 {offsets = [5, 0], sizes = [1, 8], strides = [1, 1]} : vector<8x8xi32> to vector<1x8xi32>
    %303 = arith.ori %302, %301 : vector<1x8xi32>
    %304 = vector.shape_cast %303 : vector<1x8xi32> to vector<1x1x8xi32>
    %cst_111 = arith.constant dense<-2147483648> : vector<1xi32>
    %305 = vector.multi_reduction <maxsi>, %304, %cst_111 [1, 2] : vector<1x1x8xi32> to vector<1xi32>
    %306 = vector.shape_cast %305 : vector<1xi32> to vector<1x1x1xi32>
    %307 = vector.extract %306[0, 0, 0] : i32 from vector<1x1x1xi32>
    %c0_i32_112 = arith.constant 0 : i32
    %308 = arith.cmpi sge, %307, %c0_i32_112 : i32
    %true_113 = arith.constant true
    %309 = arith.xori %163, %true_113 : i1
    %310 = arith.andi %308, %309 : i1
    %c7_i32_114 = arith.constant 7 : i32
    %311 = arith.andi %307, %c7_i32_114 : i32
    %c7_i32_115 = arith.constant 7 : i32
    %312 = arith.subi %c7_i32_115, %311 : i32
    %313 = arith.select %310, %312, %162 : i32
    %314 = vector.broadcast %312 : i32 to vector<1x8xi32>
    %315 = arith.cmpi eq, %27, %314 : vector<1x8xi32>
    %316 = vector.broadcast %310 : i1 to vector<1x8xi1>
    %317 = arith.andi %316, %315 : vector<1x8xi1>
    %c-1_i32_116 = arith.constant -1 : i32
    %318 = vector.broadcast %c-1_i32_116 : i32 to vector<1x8xi32>
    %319 = arith.select %317, %318, %301 : vector<1x8xi1>, vector<1x8xi32>
    %320 = vector.extract_strided_slice %211 {offsets = [6, 0], sizes = [1, 8], strides = [1, 1]} : vector<8x8xi32> to vector<1x8xi32>
    %321 = arith.ori %320, %319 : vector<1x8xi32>
    %322 = vector.shape_cast %321 : vector<1x8xi32> to vector<1x1x8xi32>
    %cst_117 = arith.constant dense<-2147483648> : vector<1xi32>
    %323 = vector.multi_reduction <maxsi>, %322, %cst_117 [1, 2] : vector<1x1x8xi32> to vector<1xi32>
    %324 = vector.shape_cast %323 : vector<1xi32> to vector<1x1x1xi32>
    %325 = vector.extract %324[0, 0, 0] : i32 from vector<1x1x1xi32>
    %c0_i32_118 = arith.constant 0 : i32
    %326 = arith.cmpi sge, %325, %c0_i32_118 : i32
    %true_119 = arith.constant true
    %327 = arith.xori %182, %true_119 : i1
    %328 = arith.andi %326, %327 : i1
    %c7_i32_120 = arith.constant 7 : i32
    %329 = arith.andi %325, %c7_i32_120 : i32
    %c7_i32_121 = arith.constant 7 : i32
    %330 = arith.subi %c7_i32_121, %329 : i32
    %331 = arith.select %328, %330, %181 : i32
    %332 = vector.broadcast %330 : i32 to vector<1x8xi32>
    %333 = arith.cmpi eq, %27, %332 : vector<1x8xi32>
    %334 = vector.broadcast %328 : i1 to vector<1x8xi1>
    %335 = arith.andi %334, %333 : vector<1x8xi1>
    %c-1_i32_122 = arith.constant -1 : i32
    %336 = vector.broadcast %c-1_i32_122 : i32 to vector<1x8xi32>
    %337 = arith.select %335, %336, %319 : vector<1x8xi1>, vector<1x8xi32>
    %338 = vector.extract_strided_slice %211 {offsets = [7, 0], sizes = [1, 8], strides = [1, 1]} : vector<8x8xi32> to vector<1x8xi32>
    %339 = arith.ori %338, %337 : vector<1x8xi32>
    %340 = vector.shape_cast %339 : vector<1x8xi32> to vector<1x1x8xi32>
    %cst_123 = arith.constant dense<-2147483648> : vector<1xi32>
    %341 = vector.multi_reduction <maxsi>, %340, %cst_123 [1, 2] : vector<1x1x8xi32> to vector<1xi32>
    %342 = vector.shape_cast %341 : vector<1xi32> to vector<1x1x1xi32>
    %343 = vector.extract %342[0, 0, 0] : i32 from vector<1x1x1xi32>
    %c0_i32_124 = arith.constant 0 : i32
    %344 = arith.cmpi sge, %343, %c0_i32_124 : i32
    %true_125 = arith.constant true
    %345 = arith.xori %201, %true_125 : i1
    %346 = arith.andi %344, %345 : i1
    %c7_i32_126 = arith.constant 7 : i32
    %347 = arith.andi %343, %c7_i32_126 : i32
    %c7_i32_127 = arith.constant 7 : i32
    %348 = arith.subi %c7_i32_127, %347 : i32
    %349 = arith.select %346, %348, %200 : i32
    %350 = vector.broadcast %348 : i32 to vector<1x8xi32>
    %351 = arith.cmpi eq, %27, %350 : vector<1x8xi32>
    %352 = vector.broadcast %346 : i1 to vector<1x8xi1>
    %353 = arith.andi %352, %351 : vector<1x8xi1>
    %c-1_i32_128 = arith.constant -1 : i32
    %354 = vector.broadcast %c-1_i32_128 : i32 to vector<1x8xi32>
    %355 = arith.select %353, %354, %337 : vector<1x8xi1>, vector<1x8xi32>
    %c0_129 = arith.constant 0 : index
    %356 = memref.load %arg6[%c0_129] : memref<8xi32, #tpu.memory_space<smem>>
    memref.store %223, %arg6[%c0_129] : memref<8xi32, #tpu.memory_space<smem>>
    %c1_130 = arith.constant 1 : index
    %357 = memref.load %arg6[%c1_130] : memref<8xi32, #tpu.memory_space<smem>>
    memref.store %241, %arg6[%c1_130] : memref<8xi32, #tpu.memory_space<smem>>
    %c2_131 = arith.constant 2 : index
    %358 = memref.load %arg6[%c2_131] : memref<8xi32, #tpu.memory_space<smem>>
    memref.store %259, %arg6[%c2_131] : memref<8xi32, #tpu.memory_space<smem>>
    %c3_132 = arith.constant 3 : index
    %359 = memref.load %arg6[%c3_132] : memref<8xi32, #tpu.memory_space<smem>>
    memref.store %277, %arg6[%c3_132] : memref<8xi32, #tpu.memory_space<smem>>
    %c4_133 = arith.constant 4 : index
    %360 = memref.load %arg6[%c4_133] : memref<8xi32, #tpu.memory_space<smem>>
    memref.store %295, %arg6[%c4_133] : memref<8xi32, #tpu.memory_space<smem>>
    %c5_134 = arith.constant 5 : index
    %361 = memref.load %arg6[%c5_134] : memref<8xi32, #tpu.memory_space<smem>>
    memref.store %313, %arg6[%c5_134] : memref<8xi32, #tpu.memory_space<smem>>
    %c6_135 = arith.constant 6 : index
    %362 = memref.load %arg6[%c6_135] : memref<8xi32, #tpu.memory_space<smem>>
    memref.store %331, %arg6[%c6_135] : memref<8xi32, #tpu.memory_space<smem>>
    %c7_136 = arith.constant 7 : index
    %363 = memref.load %arg6[%c7_136] : memref<8xi32, #tpu.memory_space<smem>>
    memref.store %349, %arg6[%c7_136] : memref<8xi32, #tpu.memory_space<smem>>
    %c1_i32 = arith.constant 1 : i32
    %364 = vector.broadcast %c1_i32 : i32 to vector<1x8xi32>
    %365 = arith.andi %355, %364 : vector<1x8xi32>
    %c0_137 = arith.constant 0 : index
    %c0_138 = arith.constant 0 : index
    %366 = vector.load %arg7[%c0_137, %c0_138] : memref<1x8xi32, #tpu.memory_space<vmem>>, vector<1x8xi32>
    tpu.vector_store %arg7[%c0_137, %c0_138], %365 {strides = array<i32>} : memref<1x8xi32, #tpu.memory_space<vmem>>, vector<1x8xi32>,
    return
  }
}

</mosaic_0001>

<llo_original>
// kernel: tpu_custom_call.1
$region0: #{tpu_custom_call.1}
  #allocation0 [shape = 'u32[]', space=smem, size = 0x4, offset = 0x4, fixed_abs, tag = 'smem constant byte address 0x4 - core index']
  #allocation1 [shape = 'u32[144,128]{1,0:T(1,128)}', space=vmem, size = 0x12000, scoped, tag = 'internal scratch']
  %s0 = inlined_call_operand.hbm [shape: s32[8], index: 0, kind: input, shape index: {}]
  %s1 = inlined_call_operand.hbm [shape: f32[8,128], index: 1, kind: input, shape index: {}]
  %s2 = inlined_call_operand.hbm [shape: f32[8,32], index: 2, kind: input, shape index: {}]
  %s3 = inlined_call_operand.hbm [shape: f32[32,128], index: 3, kind: input, shape index: {}]
  %s4 = inlined_call_operand.vmem [shape: f32[1,128], index: 4, kind: input, shape index: {}]
  %s5 = inlined_call_operand.hbm [shape: f32[8,128], index: 5, kind: output, shape index: {0}]
  %s6 = inlined_call_operand.hbm [shape: s32[8], index: 6, kind: output, shape index: {1}]
  %s7 = inlined_call_operand.hbm [shape: s32[1,8], index: 7, kind: output, shape index: {2}]
  %8 = xla_tuple %s5, %s6, %s7
  %s9 = sld [smem:[#allocation0]]
  $region62: #{tpu_custom_call.1} parent=0
    _
  %s11 = ssub.s32 1, %s9
  %s12 = scalar_select 0, %s11, %s9
  $region1: #{tpu_custom_call.1} parent=0
    #allocation2 [shape = 'u8[512]{0}', space=smem, size = 0x200, scoped, tag = 'input window, operand 0, single buffered']
    #allocation3 [shape = 's32[1]{0}', space=sflag, size = 0x4, scoped, tag = 'scoped memory for tpu_custom_call.1']
    #allocation4 [shape = 's32[1]{0}', space=sflag, size = 0x4, scoped, tag = 'scoped memory for tpu_custom_call.1']
    #allocation5 [shape = 's32[1]{0}', space=sflag, size = 0x4, scoped, tag = 'scoped memory for tpu_custom_call.1']
    #allocation6 [shape = 's32[1]{0}', space=sflag, size = 0x4, scoped, tag = 'scoped memory for tpu_custom_call.1']
    #allocation7 [shape = 'u8[4096]{0}', space=vmem, size = 0x1000, scoped, tag = 'input window, operand 1, single buffered']
    #allocation8 [shape = 'u8[4096]{0}', space=vmem, size = 0x1000, scoped, tag = 'input window, operand 2, single buffered']
    #allocation9 [shape = 's32[1]{0}', space=sflag, size = 0x4, scoped, tag = 'scoped memory for tpu_custom_call.1']
    #allocation10 [shape = 'u8[16384]{0}', space=vmem, size = 0x4000, scoped, tag = 'input window, operand 3, single buffered']
    #allocation11 [shape = 'u8[4096]{0}', space=vmem, size = 0x1000, scoped, tag = 'output window, operand 0, single buffered']
    #allocation12 [shape = 'u8[512]{0}', space=smem, size = 0x200, scoped, tag = 'output window, operand 1, single buffered']
    #allocation13 [shape = 'u8[512]{0}', space=vmem, size = 0x400, scoped, tag = 'output window, operand 2, single buffered']
    #allocation14 [shape = 's32[1]{0}', space=sflag, size = 0x4, scoped, tag = 'scoped memory for tpu_custom_call.1']
    %13 = vsyncpa [#allocation5], 0
    %14 = vsyncpa [#allocation3], 0
    %15 = vsyncpa [#allocation9], 0
    %16 = vsyncpa [#allocation4], 0
    %17 = vsyncpa [#allocation6], 0
    %18 = vsyncpa [#allocation14], 0
    // Predicated region
    $region2: #{tpu_custom_call.1} parent=1 // pred_check
      _
    $region3: #{tpu_custom_call.1} parent=1 // pred_check_branch
      %20 = sbr.rel (0) target = $region5
    $region4: #{tpu_custom_call.1} parent=1 // pred_region
      %s22 = ssub.s32 16, 16
      %23 = vsyncadd [#allocation5], %s22
      %26 = dma.hbm_to_smem %s0, 16, [#allocation2], [#allocation5]
    $region5: #{tpu_custom_call.1} parent=1 // pred_fallthru
      _
    // Predicated region
    $region6: #{tpu_custom_call.1} parent=1 // pred_check
      _
    $region7: #{tpu_custom_call.1} parent=1 // pred_check_branch
      %28 = sbr.rel (0) target = $region9
    $region8: #{tpu_custom_call.1} parent=1 // pred_region
      %s30 = ssub.s32 128, 128
      %31 = vsyncadd [#allocation3], %s30
      %s33 = sshll.u32 [#allocation7], 4
      %s34 = int_to_ptr.vmem [resolvable:$true] %s33
      %36 = dma.hbm_to_vmem [thread:$0]  %s1, 128, %s34, [#allocation3]
    $region9: #{tpu_custom_call.1} parent=1 // pred_fallthru
      _
    // Predicated region
    $region10: #{tpu_custom_call.1} parent=1 // pred_check
      _
    $region11: #{tpu_custom_call.1} parent=1 // pred_check_branch
      %38 = sbr.rel (0) target = $region13
    $region12: #{tpu_custom_call.1} parent=1 // pred_region
      %s40 = ssub.s32 128, 128
      %41 = vsyncadd [#allocation9], %s40
      %s43 = sshll.u32 [#allocation8], 4
      %s44 = int_to_ptr.vmem [resolvable:$true] %s43
      %46 = dma.hbm_to_vmem [thread:$0]  %s2, 128, %s44, [#allocation9]
    $region13: #{tpu_custom_call.1} parent=1 // pred_fallthru
      _
    // Predicated region
    $region14: #{tpu_custom_call.1} parent=1 // pred_check
      _
    $region15: #{tpu_custom_call.1} parent=1 // pred_check_branch
      %48 = sbr.rel (0) target = $region17
    $region16: #{tpu_custom_call.1} parent=1 // pred_region
      %s50 = ssub.s32 512, 512
      %51 = vsyncadd [#allocation9], %s50
      %s52 = sshll.u32 [#allocation10], 4
      %s53 = int_to_ptr.vmem [resolvable:$true] %s52
      %58 = dma.hbm_to_vmem [thread:$0]  %s3, 512, %s53, [#allocation9], 128, 128, 8
    $region17: #{tpu_custom_call.1} parent=1 // pred_fallthru
      _
    // Predicated region
    $region18: #{tpu_custom_call.1} parent=1 // pred_check
      _
    $region19: #{tpu_custom_call.1} parent=1 // pred_check_branch
      %60 = sbr.rel (0) target = $region21
    $region20: #{tpu_custom_call.1} parent=1 // pred_region
      _
    $region21: #{tpu_custom_call.1} parent=1 // pred_fallthru
      _
    // Predicated region
    $region22: #{tpu_custom_call.1} parent=1 // pred_check
      _
    $region23: #{tpu_custom_call.1} parent=1 // pred_check_branch
      %62 = sbr.rel (0) target = $region25
    $region24: #{tpu_custom_call.1} parent=1 // pred_region
      %63 = dma.done [#allocation5], 16
    $region25: #{tpu_custom_call.1} parent=1 // pred_fallthru
      _
    // Predicated region
    $region26: #{tpu_custom_call.1} parent=1 // pred_check
      _
    $region27: #{tpu_custom_call.1} parent=1 // pred_check_branch
      %65 = sbr.rel (0) target = $region29
    $region28: #{tpu_custom_call.1} parent=1 // pred_region
      %66 = dma.done [#allocation3], 128
    $region29: #{tpu_custom_call.1} parent=1 // pred_fallthru
      _
    // Predicated region
    $region30: #{tpu_custom_call.1} parent=1 // pred_check
      _
    $region31: #{tpu_custom_call.1} parent=1 // pred_check_branch
      %68 = sbr.rel (0) target = $region33
    $region32: #{tpu_custom_call.1} parent=1 // pred_region
      %69 = dma.done [#allocation9], 128
    $region33: #{tpu_custom_call.1} parent=1 // pred_fallthru
      _
    // Predicated region
    $region34: #{tpu_custom_call.1} parent=1 // pred_check
      _
    $region35: #{tpu_custom_call.1} parent=1 // pred_check_branch
      %71 = sbr.rel (0) target = $region37
    $region36: #{tpu_custom_call.1} parent=1 // pred_region
      %72 = dma.done [#allocation9], 512
    $region37: #{tpu_custom_call.1} parent=1 // pred_fallthru
      _
    %73 = sfence
    %v75 = vld [vmem:[#allocation8] sm:$0xff]
    %v76 = vld [vmem:[#allocation10] sm:$0xff]
    %v77 = vld [vmem:[#allocation10 + $0x8] sm:$0xff]
    %v78 = vld [vmem:[#allocation10 + $0x10] sm:$0xff]
    %v79 = vld [vmem:[#allocation10 + $0x18] sm:$0xff]
    %v80 = vld [vmem:[%s4] sm:$0x1]
    %v82 = vlaneseq
    %v83 = vshrl.u32 %v82, 7
    %v84 = vsub.s32 0, %v83
    %v85 = vrot.slane %v80, %v84
    %vm87 = vcmask 261120
    %v89 = vsel %vm87, %v75, 0
    %91 = vmatprep.subr.mxu0 0.0
    %92 = vmatpush1.msra.mxu0 0.0
    %93 = vmatprep.subr.mxu0 0.0
    %94 = vmatpush1.msra.mxu0 0.0
    %95 = vmatprep.subr.mxu0 0.0
    %96 = vmatpush1.msra.mxu0 0.0
    %97 = vmatprep.subr.mxu0 0.0
    %98 = vmatpush1.msra.mxu0 0.0
    %99 = vmatprep.subr.mxu0 0.0
    %100 = vmatpush1.msra.mxu0 0.0
    %101 = vmatprep.subr.mxu0 0.0
    %102 = vmatpush1.msra.mxu0 0.0
    %103 = vmatprep.subr.mxu0 0.0
    %104 = vmatpush1.msra.mxu0 0.0
    %105 = vmatprep.subr.mxu0 0.0
    %106 = vmatpush1.msra.mxu0 0.0
    %107 = vmatprep.subr.mxu0 0.0
    %108 = vmatpush1.msra.mxu0 0.0
    %109 = vmatprep.subr.mxu0 0.0
    %110 = vmatpush1.msra.mxu0 0.0
    %111 = vmatprep.subr.mxu0 0.0
    %112 = vmatpush1.msra.mxu0 0.0
    %113 = vmatprep.subr.mxu0 0.0
    %114 = vmatpush1.msra.mxu0 0.0
    %115 = vmatprep.subr.mxu0 0.0
    %116 = vmatpush1.msra.mxu0 %v79
    %117 = vmatprep.subr.mxu0 0.0
    %118 = vmatpush1.msra.mxu0 %v78
    %119 = vmatprep.subr.mxu0 0.0
    %120 = vmatpush1.msra.mxu0 %v77
    %121 = vmatprep.subr.mxu0 0.0
    %122 = vmatpush1.msra.mxu0 %v76
    %123 = vmatprep.subr.mxu0 0.0
    %124 = vmatpush2.msra.mxu0 0.0
    %125 = vmatprep.subr.mxu0 0.0
    %126 = vmatpush2.msra.mxu0 0.0
    %127 = vmatprep.subr.mxu0 0.0
    %128 = vmatpush2.msra.mxu0 0.0
    %129 = vmatprep.subr.mxu0 0.0
    %130 = vmatpush2.msra.mxu0 0.0
    %131 = vmatprep.subr.mxu0 0.0
    %132 = vmatpush2.msra.mxu0 0.0
    %133 = vmatprep.subr.mxu0 0.0
    %134 = vmatpush2.msra.mxu0 0.0
    %135 = vmatprep.subr.mxu0 0.0
    %136 = vmatpush2.msra.mxu0 0.0
    %137 = vmatprep.subr.mxu0 0.0
    %138 = vmatpush2.msra.mxu0 0.0
    %139 = vmatprep.subr.mxu0 0.0
    %140 = vmatpush2.msra.mxu0 0.0
    %141 = vmatprep.subr.mxu0 0.0
    %142 = vmatpush2.msra.mxu0 0.0
    %143 = vmatprep.subr.mxu0 0.0
    %144 = vmatpush2.msra.mxu0 0.0
    %145 = vmatprep.subr.mxu0 0.0
    %146 = vmatpush2.msra.mxu0 0.0
    %147 = vmatprep.subr.mxu0 0.0
    %148 = vmatpush2.msra.mxu0 0.0
    %149 = vmatprep.subr.mxu0 0.0
    %150 = vmatpush2.msra.mxu0 0.0
    %151 = vmatprep.subr.mxu0 0.0
    %152 = vmatpush2.msra.mxu0 0.0
    %153 = vmatprep.subr.mxu0 0.0
    %154 = vmatpush2.msra.mxu0 0.0
    %155 = vmatprep.mubr.f32.mxu0 0.0
    %156 = vmatmul.mubr.f32.gmra.mxu0 %v89
    %v157 = vpop.f32.mrf.mxu0
    %v158 = vadd.f32 %v85, %v157
    %v159 = vpop.f32.mrf.mxu0
    %160 = vdwg.mxu0
    %161 = vst [vmem:[#allocation11] sm:$0xff] %v158
    %v162 = vld [vmem:[#allocation7] sm:$0xff]
    %v163 = vmul.f32 %v162, %v162
    %164 = vadd.xlane.f32.xlu0 %v163
    %v165 = vpop.xlane.xlu0 %164
    %v166 = vadd.f32 %v165, 1e-12
    %v167 = vrsqrt.pop %v166
    %v168 = vmul.f32 %v162, %v167
    %v169 = vmul.f32 %v158, %v158
    %170 = vadd.xlane.f32.xlu0 %v169
    %v171 = vpop.xlane.xlu0 %170
    %v172 = vadd.f32 %v171, 1e-12
    %v173 = vrsqrt.pop %v172
    %v174 = vmul.f32 %v158, %v173
    %v175 = vpack.c.bf16 %v168, %v168
    %v176 = vpack.c.bf16 %v174, %v174
    %177 = vmatprep.subr.bf16.mxu0 0
    %178 = vmatpush1.bf16.xpose.msra.mxu0 0
    %179 = vmatprep.subr.bf16.mxu0 0
    %180 = vmatpush1.bf16.xpose.msra.mxu0 0
    %181 = vmatprep.subr.bf16.mxu0 0
    %182 = vmatpush1.bf16.xpose.msra.mxu0 0
    %183 = vmatprep.subr.bf16.mxu0 0
    %184 = vmatpush1.bf16.xpose.msra.mxu0 0
    %185 = vmatprep.subr.bf16.mxu0 0
    %186 = vmatpush1.bf16.xpose.msra.mxu0 0
    %187 = vmatprep.subr.bf16.mxu0 0
    %188 = vmatpush1.bf16.xpose.msra.mxu0 0
    %189 = vmatprep.subr.bf16.mxu0 0
    %190 = vmatpush1.bf16.xpose.msra.mxu0 0
    %191 = vmatprep.subr.bf16.mxu0 0
    %192 = vmatpush1.bf16.xpose.msra.mxu0 %v176
    %193 = vmatprep.subr.bf16.mxu0 0
    %194 = vmatpush2.bf16.xpose.msra.mxu0 0
    %195 = vmatprep.subr.bf16.mxu0 0
    %196 = vmatpush2.bf16.xpose.msra.mxu0 0
    %197 = vmatprep.subr.bf16.mxu0 0
    %198 = vmatpush2.bf16.xpose.msra.mxu0 0
    %199 = vmatprep.subr.bf16.mxu0 0
    %200 = vmatpush2.bf16.xpose.msra.mxu0 0
    %201 = vmatprep.subr.bf16.mxu0 0
    %202 = vmatpush2.bf16.xpose.msra.mxu0 0
    %203 = vmatprep.subr.bf16.mxu0 0
    %204 = vmatpush2.bf16.xpose.msra.mxu0 0
    %205 = vmatprep.subr.bf16.mxu0 0
    %206 = vmatpush2.bf16.xpose.msra.mxu0 0
    %207 = vmatprep.subr.bf16.mxu0 0
    %208 = vmatpush2.bf16.xpose.msra.mxu0 0
    %209 = vmatprep.mubr.bf16.mxu0 0
    %210 = vmatmul.mubr.bf16.gmra.mxu0 %v175
    %v211 = vpop.f32.mrf.mxu0
    %v212 = vadd.f32 0.0, %v211
    %v213 = vpop.f32.mrf.mxu0
    %v214 = vpop.f32.mrf.mxu0
    %v215 = vpop.f32.mrf.mxu0
    %216 = vdwg.mxu0
    %v217 = vlaneseq
    %v218 = vand.u32 %v217, 127
    %v219 = vsub.s32 7, %v218
    %v221 = vand.u32 %v212, 4294967288
    %v222 = vor.u32 %v221, %v219
    %s223 = sld [smem:[#allocation2]]
    %p224 = scmp.eq.s32.totalorder %s223, 0
    %s225 = sld [smem:[#allocation2 + $0x1]]
    %p226 = scmp.eq.s32.totalorder %s225, 0
    %s227 = sld [smem:[#allocation2 + $0x2]]
    %p228 = scmp.eq.s32.totalorder %s227, 0
    %s229 = sld [smem:[#allocation2 + $0x3]]
    %p230 = scmp.eq.s32.totalorder %s229, 0
    %s231 = sld [smem:[#allocation2 + $0x4]]
    %p232 = scmp.eq.s32.totalorder %s231, 0
    %s233 = sld [smem:[#allocation2 + $0x5]]
    %p234 = scmp.eq.s32.totalorder %s233, 0
    %s235 = sld [smem:[#allocation2 + $0x6]]
    %p236 = scmp.eq.s32.totalorder %s235, 0
    %s237 = sld [smem:[#allocation2 + $0x7]]
    %p238 = scmp.eq.s32.totalorder %s237, 0
    %vm239 = vcmp.gt.f32.partialorder %v212, 0.7
    %v240 = vsel %vm239, %v222, 4294967295
    %vm241 = vcmask 57344
    %v242 = vsel %vm241, %v240, 2147483648
    %v243 = vand.u32 %v242, 65535
    %v244 = vshra.s32 %v242, 16
    %v245 = vcvt.s32.f32 %v243
    %v246 = vcvt.s32.f32 %v244
    %247 = vmax.xlane.f32.xlu0 %v246
    %v248 = vpop.xlane.xlu0 %247
    %vm249 = vcmp.eq.f32.partialorder %v246, %v248
    %v250 = vsel %vm249, %v245, -inf
    %251 = vmax.xlane.f32.xlu0 %v250
    %v252 = vpop.xlane.xlu0 %251
    %v253 = vcvt.f32.s32 %v252
    %v254 = vcvt.f32.s32 %v248
    %v255 = vshll.u32 %v254, 16
    %v256 = vadd.s32 %v255, %v253
    %v257 = vrot.slane %v256, 4
    %vm258 = vcmp.gt.s32.totalorder %v256, %v257
    %v259 = vsel %vm258, %v256, %v257
    %v260 = vrot.slane %v259, 2
    %vm261 = vcmp.gt.s32.totalorder %v259, %v260
    %v262 = vsel %vm261, %v259, %v260
    %v263 = vrot.slane %v262, 1
    %vm264 = vcmp.gt.s32.totalorder %v262, %v263
    %v265 = vsel %vm264, %v262, %v263
    %s266 = vtos %v265
    %p267 = scmp.ge.s32.totalorder %s266, 0
    %p268 = scmp.ne.s32.totalorder %s223, 0
    %p269 = pnand %p267, %p268
    %p270 = pneg %p269
    %s271 = sand.u32 %s266, 7
    %s272 = ssub.s32 7, %s271
    %s273 = scalar_select %p270, %s272, 4294967295
    %p274 = por %p224, %p270
    %v275 = vstv %s272
    %vm276 = vcmp.eq.s32.totalorder %v218, %v275
    %s277 = scalar_select %p270, 1, 0
    %v278 = vstv %s277
    %vm279 = vcmp.eq.s32.totalorder %v278, 1
    %vm280 = vmand %vm279, %vm276
    %v281 = vsel %vm280, 4294967295, 0
    %v282 = vor.u32 %v240, %v281
    %vm283 = vcmask 58369
    %v284 = vsel %vm283, %v282, 2147483648
    %v285 = vand.u32 %v284, 65535
    %v286 = vshra.s32 %v284, 16
    %v287 = vcvt.s32.f32 %v285
    %v288 = vcvt.s32.f32 %v286
    %289 = vmax.xlane.f32.xlu0 %v288
    %v290 = vpop.xlane.xlu0 %289
    %vm291 = vcmp.eq.f32.partialorder %v288, %v290
    %v292 = vsel %vm291, %v287, -inf
    %293 = vmax.xlane.f32.xlu0 %v292
    %v294 = vpop.xlane.xlu0 %293
    %v295 = vcvt.f32.s32 %v294
    %v296 = vcvt.f32.s32 %v290
    %v297 = vshll.u32 %v296, 16
    %v298 = vadd.s32 %v297, %v295
    %v299 = vrot.slane %v298, 4
    %vm300 = vcmp.gt.s32.totalorder %v298, %v299
    %v301 = vsel %vm300, %v298, %v299
    %v302 = vrot.slane %v301, 2
    %vm303 = vcmp.gt.s32.totalorder %v301, %v302
    %v304 = vsel %vm303, %v301, %v302
    %v305 = vrot.slane %v304, 1
    %vm306 = vcmp.gt.s32.totalorder %v304, %v305
    %v307 = vsel %vm306, %v304, %v305
    %s308 = vtos %v307
    %p309 = scmp.ge.s32.totalorder %s308, 0
    %p310 = scmp.ne.s32.totalorder %s225, 0
    %p311 = pnand %p309, %p310
    %p312 = pneg %p311
    %s313 = sand.u32 %s308, 7
    %s314 = ssub.s32 7, %s313
    %s315 = scalar_select %p312, %s314, 4294967295
    %p316 = por %p226, %p312
    %v317 = vstv %s314
    %vm318 = vcmp.eq.s32.totalorder %v218, %v317
    %s319 = scalar_select %p312, 1, 0
    %v320 = vstv %s319
    %vm321 = vcmp.eq.s32.totalorder %v320, 1
    %vm322 = vmand %vm321, %vm318
    %v323 = vsel %vm322, 4294967295, %v281
    %v324 = vor.u32 %v240, %v323
    %vm325 = vcmask 59394
    %v326 = vsel %vm325, %v324, 2147483648
    %v327 = vand.u32 %v326, 65535
    %v328 = vshra.s32 %v326, 16
    %v329 = vcvt.s32.f32 %v327
    %v330 = vcvt.s32.f32 %v328
    %331 = vmax.xlane.f32.xlu0 %v330
    %v332 = vpop.xlane.xlu0 %331
    %vm333 = vcmp.eq.f32.partialorder %v330, %v332
    %v334 = vsel %vm333, %v329, -inf
    %335 = vmax.xlane.f32.xlu0 %v334
    %v336 = vpop.xlane.xlu0 %335
    %v337 = vcvt.f32.s32 %v336
    %v338 = vcvt.f32.s32 %v332
    %v339 = vshll.u32 %v338, 16
    %v340 = vadd.s32 %v339, %v337
    %v341 = vrot.slane %v340, 4
    %vm342 = vcmp.gt.s32.totalorder %v340, %v341
    %v343 = vsel %vm342, %v340, %v341
    %v344 = vrot.slane %v343, 2
    %vm345 = vcmp.gt.s32.totalorder %v343, %v344
    %v346 = vsel %vm345, %v343, %v344
    %v347 = vrot.slane %v346, 1
    %vm348 = vcmp.gt.s32.totalorder %v346, %v347
    %v349 = vsel %vm348, %v346, %v347
    %s350 = vtos %v349
    %p351 = scmp.ge.s32.totalorder %s350, 0
    %p352 = scmp.ne.s32.totalorder %s227, 0
    %p353 = pnand %p351, %p352
    %p354 = pneg %p353
    %s355 = sand.u32 %s350, 7
    %s356 = ssub.s32 7, %s355
    %s357 = scalar_select %p354, %s356, 4294967295
    %p358 = por %p228, %p354
    %v359 = vstv %s356
    %vm360 = vcmp.eq.s32.totalorder %v218, %v359
    %s361 = scalar_select %p354, 1, 0
    %v362 = vstv %s361
    %vm363 = vcmp.eq.s32.totalorder %v362, 1
    %vm364 = vmand %vm363, %vm360
    %v365 = vsel %vm364, 4294967295, %v323
    %v366 = vor.u32 %v240, %v365
    %vm367 = vcmask 60419
    %v368 = vsel %vm367, %v366, 2147483648
    %v369 = vand.u32 %v368, 65535
    %v370 = vshra.s32 %v368, 16
    %v371 = vcvt.s32.f32 %v369
    %v372 = vcvt.s32.f32 %v370
    %373 = vmax.xlane.f32.xlu0 %v372
    %v374 = vpop.xlane.xlu0 %373
    %vm375 = vcmp.eq.f32.partialorder %v372, %v374
    %v376 = vsel %vm375, %v371, -inf
    %377 = vmax.xlane.f32.xlu0 %v376
    %v378 = vpop.xlane.xlu0 %377
    %v379 = vcvt.f32.s32 %v378
    %v380 = vcvt.f32.s32 %v374
    %v381 = vshll.u32 %v380, 16
    %v382 = vadd.s32 %v381, %v379
    %v383 = vrot.slane %v382, 4
    %vm384 = vcmp.gt.s32.totalorder %v382, %v383
    %v385 = vsel %vm384, %v382, %v383
    %v386 = vrot.slane %v385, 2
    %vm387 = vcmp.gt.s32.totalorder %v385, %v386
    %v388 = vsel %vm387, %v385, %v386
    %v389 = vrot.slane %v388, 1
    %vm390 = vcmp.gt.s32.totalorder %v388, %v389
    %v391 = vsel %vm390, %v388, %v389
    %s392 = vtos %v391
    %p393 = scmp.ge.s32.totalorder %s392, 0
    %p394 = scmp.ne.s32.totalorder %s229, 0
    %p395 = pnand %p393, %p394
    %p396 = pneg %p395
    %s397 = sand.u32 %s392, 7
    %s398 = ssub.s32 7, %s397
    %s399 = scalar_select %p396, %s398, 4294967295
    %p400 = por %p230, %p396
    %v401 = vstv %s398
    %vm402 = vcmp.eq.s32.totalorder %v218, %v401
    %s403 = scalar_select %p396, 1, 0
    %v404 = vstv %s403
    %vm405 = vcmp.eq.s32.totalorder %v404, 1
    %vm406 = vmand %vm405, %vm402
    %v407 = vsel %vm406, 4294967295, %v365
    %v408 = vor.u32 %v240, %v407
    %vm409 = vcmask 61444
    %v410 = vsel %vm409, %v408, 2147483648
    %v411 = vand.u32 %v410, 65535
    %v412 = vshra.s32 %v410, 16
    %v413 = vcvt.s32.f32 %v411
    %v414 = vcvt.s32.f32 %v412
    %415 = vmax.xlane.f32.xlu0 %v414
    %v416 = vpop.xlane.xlu0 %415
    %vm417 = vcmp.eq.f32.partialorder %v414, %v416
    %v418 = vsel %vm417, %v413, -inf
    %419 = vmax.xlane.f32.xlu0 %v418
    %v420 = vpop.xlane.xlu0 %419
    %v421 = vcvt.f32.s32 %v420
    %v422 = vcvt.f32.s32 %v416
    %v423 = vshll.u32 %v422, 16
    %v424 = vadd.s32 %v423, %v421
    %v425 = vrot.slane %v424, 4
    %vm426 = vcmp.gt.s32.totalorder %v424, %v425
    %v427 = vsel %vm426, %v424, %v425
    %v428 = vrot.slane %v427, 2
    %vm429 = vcmp.gt.s32.totalorder %v427, %v428
    %v430 = vsel %vm429, %v427, %v428
    %v431 = vrot.slane %v430, 1
    %vm432 = vcmp.gt.s32.totalorder %v430, %v431
    %v433 = vsel %vm432, %v430, %v431
    %s434 = vtos %v433
    %p435 = scmp.ge.s32.totalorder %s434, 0
    %p436 = scmp.ne.s32.totalorder %s231, 0
    %p437 = pnand %p435, %p436
    %p438 = pneg %p437
    %s439 = sand.u32 %s434, 7
    %s440 = ssub.s32 7, %s439
    %s441 = scalar_select %p438, %s440, 4294967295
    %p442 = por %p232, %p438
    %v443 = vstv %s440
    %vm444 = vcmp.eq.s32.totalorder %v218, %v443
    %s445 = scalar_select %p438, 1, 0
    %v446 = vstv %s445
    %vm447 = vcmp.eq.s32.totalorder %v446, 1
    %vm448 = vmand %vm447, %vm444
    %v449 = vsel %vm448, 4294967295, %v407
    %v450 = vor.u32 %v240, %v449
    %vm451 = vcmask 62469
    %v452 = vsel %vm451, %v450, 2147483648
    %v453 = vand.u32 %v452, 65535
    %v454 = vshra.s32 %v452, 16
    %v455 = vcvt.s32.f32 %v453
    %v456 = vcvt.s32.f32 %v454
    %457 = vmax.xlane.f32.xlu0 %v456
    %v458 = vpop.xlane.xlu0 %457
    %vm459 = vcmp.eq.f32.partialorder %v456, %v458
    %v460 = vsel %vm459, %v455, -inf
    %461 = vmax.xlane.f32.xlu0 %v460
    %v462 = vpop.xlane.xlu0 %461
    %v463 = vcvt.f32.s32 %v462
    %v464 = vcvt.f32.s32 %v458
    %v465 = vshll.u32 %v464, 16
    %v466 = vadd.s32 %v465, %v463
    %v467 = vrot.slane %v466, 4
    %vm468 = vcmp.gt.s32.totalorder %v466, %v467
    %v469 = vsel %vm468, %v466, %v467
    %v470 = vrot.slane %v469, 2
    %vm471 = vcmp.gt.s32.totalorder %v469, %v470
    %v472 = vsel %vm471, %v469, %v470
    %v473 = vrot.slane %v472, 1
    %vm474 = vcmp.gt.s32.totalorder %v472, %v473
    %v475 = vsel %vm474, %v472, %v473
    %s476 = vtos %v475
    %p477 = scmp.ge.s32.totalorder %s476, 0
    %p478 = scmp.ne.s32.totalorder %s233, 0
    %p479 = pnand %p477, %p478
    %p480 = pneg %p479
    %s481 = sand.u32 %s476, 7
    %s482 = ssub.s32 7, %s481
    %s483 = scalar_select %p480, %s482, 4294967295
    %p484 = por %p234, %p480
    %v485 = vstv %s482
    %vm486 = vcmp.eq.s32.totalorder %v218, %v485
    %s487 = scalar_select %p480, 1, 0
    %v488 = vstv %s487
    %vm489 = vcmp.eq.s32.totalorder %v488, 1
    %vm490 = vmand %vm489, %vm486
    %v491 = vsel %vm490, 4294967295, %v449
    %v492 = vor.u32 %v240, %v491
    %vm493 = vcmask 63494
    %v494 = vsel %vm493, %v492, 2147483648
    %v495 = vand.u32 %v494, 65535
    %v496 = vshra.s32 %v494, 16
    %v497 = vcvt.s32.f32 %v495
    %v498 = vcvt.s32.f32 %v496
    %499 = vmax.xlane.f32.xlu0 %v498
    %v500 = vpop.xlane.xlu0 %499
    %vm501 = vcmp.eq.f32.partialorder %v498, %v500
    %v502 = vsel %vm501, %v497, -inf
    %503 = vmax.xlane.f32.xlu0 %v502
    %v504 = vpop.xlane.xlu0 %503
    %v505 = vcvt.f32.s32 %v504
    %v506 = vcvt.f32.s32 %v500
    %v507 = vshll.u32 %v506, 16
    %v508 = vadd.s32 %v507, %v505
    %v509 = vrot.slane %v508, 4
    %vm510 = vcmp.gt.s32.totalorder %v508, %v509
    %v511 = vsel %vm510, %v508, %v509
    %v512 = vrot.slane %v511, 2
    %vm513 = vcmp.gt.s32.totalorder %v511, %v512
    %v514 = vsel %vm513, %v511, %v512
    %v515 = vrot.slane %v514, 1
    %vm516 = vcmp.gt.s32.totalorder %v514, %v515
    %v517 = vsel %vm516, %v514, %v515
    %s518 = vtos %v517
    %p519 = scmp.ge.s32.totalorder %s518, 0
    %p520 = scmp.ne.s32.totalorder %s235, 0
    %p521 = pnand %p519, %p520
    %p522 = pneg %p521
    %s523 = sand.u32 %s518, 7
    %s524 = ssub.s32 7, %s523
    %s525 = scalar_select %p522, %s524, 4294967295
    %p526 = por %p236, %p522
    %v527 = vstv %s524
    %vm528 = vcmp.eq.s32.totalorder %v218, %v527
    %s529 = scalar_select %p522, 1, 0
    %v530 = vstv %s529
    %vm531 = vcmp.eq.s32.totalorder %v530, 1
    %vm532 = vmand %vm531, %vm528
    %v533 = vsel %vm532, 4294967295, %v491
    %v534 = vor.u32 %v240, %v533
    %vm535 = vcmask 64519
    %v536 = vsel %vm535, %v534, 2147483648
    %v537 = vand.u32 %v536, 65535
    %v538 = vshra.s32 %v536, 16
    %v539 = vcvt.s32.f32 %v537
    %v540 = vcvt.s32.f32 %v538
    %541 = vmax.xlane.f32.xlu0 %v540
    %v542 = vpop.xlane.xlu0 %541
    %vm543 = vcmp.eq.f32.partialorder %v540, %v542
    %v544 = vsel %vm543, %v539, -inf
    %545 = vmax.xlane.f32.xlu0 %v544
    %v546 = vpop.xlane.xlu0 %545
    %v547 = vcvt.f32.s32 %v546
    %v548 = vcvt.f32.s32 %v542
    %v549 = vshll.u32 %v548, 16
    %v550 = vadd.s32 %v549, %v547
    %v551 = vrot.slane %v550, 4
    %vm552 = vcmp.gt.s32.totalorder %v550, %v551
    %v553 = vsel %vm552, %v550, %v551
    %v554 = vrot.slane %v553, 2
    %vm555 = vcmp.gt.s32.totalorder %v553, %v554
    %v556 = vsel %vm555, %v553, %v554
    %v557 = vrot.slane %v556, 1
    %vm558 = vcmp.gt.s32.totalorder %v556, %v557
    %v559 = vsel %vm558, %v556, %v557
    %s560 = vtos %v559
    %p561 = scmp.ge.s32.totalorder %s560, 0
    %p562 = scmp.ne.s32.totalorder %s237, 0
    %p563 = pnand %p561, %p562
    %p564 = pneg %p563
    %s565 = sand.u32 %s560, 7
    %s566 = ssub.s32 7, %s565
    %s567 = scalar_select %p564, %s566, 4294967295
    %p568 = por %p238, %p564
    %v569 = vstv %s566
    %vm570 = vcmp.eq.s32.totalorder %v218, %v569
    %s571 = scalar_select %p564, 1, 0
    %v572 = vstv %s571
    %vm573 = vcmp.eq.s32.totalorder %v572, 1
    %vm574 = vmand %vm573, %vm570
    %v575 = vsel %vm574, 4294967295, %v533
    %vm576 = vcmp.gt.f32.partialorder %v212, 0.3
    %v577 = vsel %vm576, %v222, 4294967295
    %v578 = vor.u32 %v577, %v575
    %v579 = vsel %vm241, %v578, 2147483648
    %v580 = vand.u32 %v579, 65535
    %v581 = vshra.s32 %v579, 16
    %v582 = vcvt.s32.f32 %v580
    %v583 = vcvt.s32.f32 %v581
    %584 = vmax.xlane.f32.xlu0 %v583
    %v585 = vpop.xlane.xlu0 %584
    %vm586 = vcmp.eq.f32.partialorder %v583, %v585
    %v587 = vsel %vm586, %v582, -inf
    %588 = vmax.xlane.f32.xlu0 %v587
    %v589 = vpop.xlane.xlu0 %588
    %v590 = vcvt.f32.s32 %v589
    %v591 = vcvt.f32.s32 %v585
    %v592 = vshll.u32 %v591, 16
    %v593 = vadd.s32 %v592, %v590
    %v594 = vrot.slane %v593, 4
    %vm595 = vcmp.gt.s32.totalorder %v593, %v594
    %v596 = vsel %vm595, %v593, %v594
    %v597 = vrot.slane %v596, 2
    %vm598 = vcmp.gt.s32.totalorder %v596, %v597
    %v599 = vsel %vm598, %v596, %v597
    %v600 = vrot.slane %v599, 1
    %vm601 = vcmp.gt.s32.totalorder %v599, %v600
    %v602 = vsel %vm601, %v599, %v600
    %s603 = vtos %v602
    %p604 = scmp.ge.s32.totalorder %s603, 0
    %p605 = pneg %p274
    %p606 = pnand %p604, %p605
    %p607 = pneg %p606
    %s608 = sand.u32 %s603, 7
    %s609 = ssub.s32 7, %s608
    %s610 = scalar_select %p607, %s609, %s273
    %v611 = vstv %s609
    %vm612 = vcmp.eq.s32.totalorder %v218, %v611
    %s613 = scalar_select %p607, 1, 0
    %v614 = vstv %s613
    %vm615 = vcmp.eq.s32.totalorder %v614, 1
    %vm616 = vmand %vm615, %vm612
    %v617 = vsel %vm616, 4294967295, %v575
    %v618 = vor.u32 %v577, %v617
    %v619 = vsel %vm283, %v618, 2147483648
    %v620 = vand.u32 %v619, 65535
    %v621 = vshra.s32 %v619, 16
    %v622 = vcvt.s32.f32 %v620
    %v623 = vcvt.s32.f32 %v621
    %624 = vmax.xlane.f32.xlu0 %v623
    %v625 = vpop.xlane.xlu0 %624
    %vm626 = vcmp.eq.f32.partialorder %v623, %v625
    %v627 = vsel %vm626, %v622, -inf
    %628 = vmax.xlane.f32.xlu0 %v627
    %v629 = vpop.xlane.xlu0 %628
    %v630 = vcvt.f32.s32 %v629
    %v631 = vcvt.f32.s32 %v625
    %v632 = vshll.u32 %v631, 16
    %v633 = vadd.s32 %v632, %v630
    %v634 = vrot.slane %v633, 4
    %vm635 = vcmp.gt.s32.totalorder %v633, %v634
    %v636 = vsel %vm635, %v633, %v634
    %v637 = vrot.slane %v636, 2
    %vm638 = vcmp.gt.s32.totalorder %v636, %v637
    %v639 = vsel %vm638, %v636, %v637
    %v640 = vrot.slane %v639, 1
    %vm641 = vcmp.gt.s32.totalorder %v639, %v640
    %v642 = vsel %vm641, %v639, %v640
    %s643 = vtos %v642
    %p644 = scmp.ge.s32.totalorder %s643, 0
    %p645 = pneg %p316
    %p646 = pnand %p644, %p645
    %p647 = pneg %p646
    %s648 = sand.u32 %s643, 7
    %s649 = ssub.s32 7, %s648
    %s650 = scalar_select %p647, %s649, %s315
    %v651 = vstv %s649
    %vm652 = vcmp.eq.s32.totalorder %v218, %v651
    %s653 = scalar_select %p647, 1, 0
    %v654 = vstv %s653
    %vm655 = vcmp.eq.s32.totalorder %v654, 1
    %vm656 = vmand %vm655, %vm652
    %v657 = vsel %vm656, 4294967295, %v617
    %v658 = vor.u32 %v577, %v657
    %v659 = vsel %vm325, %v658, 2147483648
    %v660 = vand.u32 %v659, 65535
    %v661 = vshra.s32 %v659, 16
    %v662 = vcvt.s32.f32 %v660
    %v663 = vcvt.s32.f32 %v661
    %664 = vmax.xlane.f32.xlu0 %v663
    %v665 = vpop.xlane.xlu0 %664
    %vm666 = vcmp.eq.f32.partialorder %v663, %v665
    %v667 = vsel %vm666, %v662, -inf
    %668 = vmax.xlane.f32.xlu0 %v667
    %v669 = vpop.xlane.xlu0 %668
    %v670 = vcvt.f32.s32 %v669
    %v671 = vcvt.f32.s32 %v665
    %v672 = vshll.u32 %v671, 16
    %v673 = vadd.s32 %v672, %v670
    %v674 = vrot.slane %v673, 4
    %vm675 = vcmp.gt.s32.totalorder %v673, %v674
    %v676 = vsel %vm675, %v673, %v674
    %v677 = vrot.slane %v676, 2
    %vm678 = vcmp.gt.s32.totalorder %v676, %v677
    %v679 = vsel %vm678, %v676, %v677
    %v680 = vrot.slane %v679, 1
    %vm681 = vcmp.gt.s32.totalorder %v679, %v680
    %v682 = vsel %vm681, %v679, %v680
    %s683 = vtos %v682
    %p684 = scmp.ge.s32.totalorder %s683, 0
    %p685 = pneg %p358
    %p686 = pnand %p684, %p685
    %p687 = pneg %p686
    %s688 = sand.u32 %s683, 7
    %s689 = ssub.s32 7, %s688
    %s690 = scalar_select %p687, %s689, %s357
    %v691 = vstv %s689
    %vm692 = vcmp.eq.s32.totalorder %v218, %v691
    %s693 = scalar_select %p687, 1, 0
    %v694 = vstv %s693
    %vm695 = vcmp.eq.s32.totalorder %v694, 1
    %vm696 = vmand %vm695, %vm692
    %v697 = vsel %vm696, 4294967295, %v657
    %v698 = vor.u32 %v577, %v697
    %v699 = vsel %vm367, %v698, 2147483648
    %v700 = vand.u32 %v699, 65535
    %v701 = vshra.s32 %v699, 16
    %v702 = vcvt.s32.f32 %v700
    %v703 = vcvt.s32.f32 %v701
    %704 = vmax.xlane.f32.xlu0 %v703
    %v705 = vpop.xlane.xlu0 %704
    %vm706 = vcmp.eq.f32.partialorder %v703, %v705
    %v707 = vsel %vm706, %v702, -inf
    %708 = vmax.xlane.f32.xlu0 %v707
    %v709 = vpop.xlane.xlu0 %708
    %v710 = vcvt.f32.s32 %v709
    %v711 = vcvt.f32.s32 %v705
    %v712 = vshll.u32 %v711, 16
    %v713 = vadd.s32 %v712, %v710
    %v714 = vrot.slane %v713, 4
    %vm715 = vcmp.gt.s32.totalorder %v713, %v714
    %v716 = vsel %vm715, %v713, %v714
    %v717 = vrot.slane %v716, 2
    %vm718 = vcmp.gt.s32.totalorder %v716, %v717
    %v719 = vsel %vm718, %v716, %v717
    %v720 = vrot.slane %v719, 1
    %vm721 = vcmp.gt.s32.totalorder %v719, %v720
    %v722 = vsel %vm721, %v719, %v720
    %s723 = vtos %v722
    %p724 = scmp.ge.s32.totalorder %s723, 0
    %p725 = pneg %p400
    %p726 = pnand %p724, %p725
    %p727 = pneg %p726
    %s728 = sand.u32 %s723, 7
    %s729 = ssub.s32 7, %s728
    %s730 = scalar_select %p727, %s729, %s399
    %v731 = vstv %s729
    %vm732 = vcmp.eq.s32.totalorder %v218, %v731
    %s733 = scalar_select %p727, 1, 0
    %v734 = vstv %s733
    %vm735 = vcmp.eq.s32.totalorder %v734, 1
    %vm736 = vmand %vm735, %vm732
    %v737 = vsel %vm736, 4294967295, %v697
    %v738 = vor.u32 %v577, %v737
    %v739 = vsel %vm409, %v738, 2147483648
    %v740 = vand.u32 %v739, 65535
    %v741 = vshra.s32 %v739, 16
    %v742 = vcvt.s32.f32 %v740
    %v743 = vcvt.s32.f32 %v741
    %744 = vmax.xlane.f32.xlu0 %v743
    %v745 = vpop.xlane.xlu0 %744
    %vm746 = vcmp.eq.f32.partialorder %v743, %v745
    %v747 = vsel %vm746, %v742, -inf
    %748 = vmax.xlane.f32.xlu0 %v747
    %v749 = vpop.xlane.xlu0 %748
    %v750 = vcvt.f32.s32 %v749
    %v751 = vcvt.f32.s32 %v745
    %v752 = vshll.u32 %v751, 16
    %v753 = vadd.s32 %v752, %v750
    %v754 = vrot.slane %v753, 4
    %vm755 = vcmp.gt.s32.totalorder %v753, %v754
    %v756 = vsel %vm755, %v753, %v754
    %v757 = vrot.slane %v756, 2
    %vm758 = vcmp.gt.s32.totalorder %v756, %v757
    %v759 = vsel %vm758, %v756, %v757
    %v760 = vrot.slane %v759, 1
    %vm761 = vcmp.gt.s32.totalorder %v759, %v760
    %v762 = vsel %vm761, %v759, %v760
    %s763 = vtos %v762
    %p764 = scmp.ge.s32.totalorder %s763, 0
    %p765 = pneg %p442
    %p766 = pnand %p764, %p765
    %p767 = pneg %p766
    %s768 = sand.u32 %s763, 7
    %s769 = ssub.s32 7, %s768
    %s770 = scalar_select %p767, %s769, %s441
    %v771 = vstv %s769
    %vm772 = vcmp.eq.s32.totalorder %v218, %v771
    %s773 = scalar_select %p767, 1, 0
    %v774 = vstv %s773
    %vm775 = vcmp.eq.s32.totalorder %v774, 1
    %vm776 = vmand %vm775, %vm772
    %v777 = vsel %vm776, 4294967295, %v737
    %v778 = vor.u32 %v577, %v777
    %v779 = vsel %vm451, %v778, 2147483648
    %v780 = vand.u32 %v779, 65535
    %v781 = vshra.s32 %v779, 16
    %v782 = vcvt.s32.f32 %v780
    %v783 = vcvt.s32.f32 %v781
    %784 = vmax.xlane.f32.xlu0 %v783
    %v785 = vpop.xlane.xlu0 %784
    %vm786 = vcmp.eq.f32.partialorder %v783, %v785
    %v787 = vsel %vm786, %v782, -inf
    %788 = vmax.xlane.f32.xlu0 %v787
    %v789 = vpop.xlane.xlu0 %788
    %v790 = vcvt.f32.s32 %v789
    %v791 = vcvt.f32.s32 %v785
    %v792 = vshll.u32 %v791, 16
    %v793 = vadd.s32 %v792, %v790
    %v794 = vrot.slane %v793, 4
    %vm795 = vcmp.gt.s32.totalorder %v793, %v794
    %v796 = vsel %vm795, %v793, %v794
    %v797 = vrot.slane %v796, 2
    %vm798 = vcmp.gt.s32.totalorder %v796, %v797
    %v799 = vsel %vm798, %v796, %v797
    %v800 = vrot.slane %v799, 1
    %vm801 = vcmp.gt.s32.totalorder %v799, %v800
    %v802 = vsel %vm801, %v799, %v800
    %s803 = vtos %v802
    %p804 = scmp.ge.s32.totalorder %s803, 0
    %p805 = pneg %p484
    %p806 = pnand %p804, %p805
    %p807 = pneg %p806
    %s808 = sand.u32 %s803, 7
    %s809 = ssub.s32 7, %s808
    %s810 = scalar_select %p807, %s809, %s483
    %v811 = vstv %s809
    %vm812 = vcmp.eq.s32.totalorder %v218, %v811
    %s813 = scalar_select %p807, 1, 0
    %v814 = vstv %s813
    %vm815 = vcmp.eq.s32.totalorder %v814, 1
    %vm816 = vmand %vm815, %vm812
    %v817 = vsel %vm816, 4294967295, %v777
    %v818 = vor.u32 %v577, %v817
    %v819 = vsel %vm493, %v818, 2147483648
    %v820 = vand.u32 %v819, 65535
    %v821 = vshra.s32 %v819, 16
    %v822 = vcvt.s32.f32 %v820
    %v823 = vcvt.s32.f32 %v821
    %824 = vmax.xlane.f32.xlu0 %v823
    %v825 = vpop.xlane.xlu0 %824
    %vm826 = vcmp.eq.f32.partialorder %v823, %v825
    %v827 = vsel %vm826, %v822, -inf
    %828 = vmax.xlane.f32.xlu0 %v827
    %v829 = vpop.xlane.xlu0 %828
    %v830 = vcvt.f32.s32 %v829
    %v831 = vcvt.f32.s32 %v825
    %v832 = vshll.u32 %v831, 16
    %v833 = vadd.s32 %v832, %v830
    %v834 = vrot.slane %v833, 4
    %vm835 = vcmp.gt.s32.totalorder %v833, %v834
    %v836 = vsel %vm835, %v833, %v834
    %v837 = vrot.slane %v836, 2
    %vm838 = vcmp.gt.s32.totalorder %v836, %v837
    %v839 = vsel %vm838, %v836, %v837
    %v840 = vrot.slane %v839, 1
    %vm841 = vcmp.gt.s32.totalorder %v839, %v840
    %v842 = vsel %vm841, %v839, %v840
    %s843 = vtos %v842
    %p844 = scmp.ge.s32.totalorder %s843, 0
    %p845 = pneg %p526
    %p846 = pnand %p844, %p845
    %p847 = pneg %p846
    %s848 = sand.u32 %s843, 7
    %s849 = ssub.s32 7, %s848
    %s850 = scalar_select %p847, %s849, %s525
    %v851 = vstv %s849
    %vm852 = vcmp.eq.s32.totalorder %v218, %v851
    %s853 = scalar_select %p847, 1, 0
    %v854 = vstv %s853
    %vm855 = vcmp.eq.s32.totalorder %v854, 1
    %vm856 = vmand %vm855, %vm852
    %v857 = vsel %vm856, 4294967295, %v817
    %v858 = vor.u32 %v577, %v857
    %v859 = vsel %vm535, %v858, 2147483648
    %v860 = vand.u32 %v859, 65535
    %v861 = vshra.s32 %v859, 16
    %v862 = vcvt.s32.f32 %v860
    %v863 = vcvt.s32.f32 %v861
    %864 = vmax.xlane.f32.xlu0 %v863
    %v865 = vpop.xlane.xlu0 %864
    %vm866 = vcmp.eq.f32.partialorder %v863, %v865
    %v867 = vsel %vm866, %v862, -inf
    %868 = vmax.xlane.f32.xlu0 %v867
    %v869 = vpop.xlane.xlu0 %868
    %v870 = vcvt.f32.s32 %v869
    %v871 = vcvt.f32.s32 %v865
    %v872 = vshll.u32 %v871, 16
    %v873 = vadd.s32 %v872, %v870
    %v874 = vrot.slane %v873, 4
    %vm875 = vcmp.gt.s32.totalorder %v873, %v874
    %v876 = vsel %vm875, %v873, %v874
    %v877 = vrot.slane %v876, 2
    %vm878 = vcmp.gt.s32.totalorder %v876, %v877
    %v879 = vsel %vm878, %v876, %v877
    %v880 = vrot.slane %v879, 1
    %vm881 = vcmp.gt.s32.totalorder %v879, %v880
    %v882 = vsel %vm881, %v879, %v880
    %s883 = vtos %v882
    %p884 = scmp.ge.s32.totalorder %s883, 0
    %p885 = pneg %p568
    %p886 = pnand %p884, %p885
    %p887 = pneg %p886
    %s888 = sand.u32 %s883, 7
    %s889 = ssub.s32 7, %s888
    %s890 = scalar_select %p887, %s889, %s567
    %v891 = vstv %s889
    %vm892 = vcmp.eq.s32.totalorder %v218, %v891
    %s893 = scalar_select %p887, 1, 0
    %v894 = vstv %s893
    %vm895 = vcmp.eq.s32.totalorder %v894, 1
    %vm896 = vmand %vm895, %vm892
    %v897 = vsel %vm896, 4294967295, %v857
    %s898 = scalar_lea.smem [#allocation12], 0
    %899 = sst [smem:[%s898]] %s610
    %s900 = scalar_lea.smem [#allocation12], 1
    %901 = sst [smem:[%s900]] %s650
    %s902 = scalar_lea.smem [#allocation12], 2
    %903 = sst [smem:[%s902]] %s690
    %s904 = scalar_lea.smem [#allocation12], 3
    %905 = sst [smem:[%s904]] %s730
    %s906 = scalar_lea.smem [#allocation12], 4
    %907 = sst [smem:[%s906]] %s770
    %s908 = scalar_lea.smem [#allocation12], 5
    %909 = sst [smem:[%s908]] %s810
    %s910 = scalar_lea.smem [#allocation12], 6
    %911 = sst [smem:[%s910]] %s850
    %s912 = scalar_lea.smem [#allocation12], 7
    %913 = sst [smem:[%s912]] %s890
    %v914 = vand.u32 %v897, 1
    %915 = vst.msk [vmem:[#allocation13] sm:$0x1] %vm241, %v914
    // Predicated region
    $region38: #{tpu_custom_call.1} parent=1 // pred_check
      _
    $region39: #{tpu_custom_call.1} parent=1 // pred_check_branch
      %917 = sbr.rel (0) target = $region41
    $region40: #{tpu_custom_call.1} parent=1 // pred_region
      %s919 = ssub.s32 128, 128
      %920 = vsyncadd [#allocation4], %s919
      %s922 = sshll.u32 [#allocation11], 4
      %s923 = int_to_ptr.vmem [resolvable:$true] %s922
      %925 = dma.vmem_to_hbm [thread:$0]  %s923, 128, %s5, [#allocation4]
    $region41: #{tpu_custom_call.1} parent=1 // pred_fallthru
      _
    // Predicated region
    $region42: #{tpu_custom_call.1} parent=1 // pred_check
      _
    $region43: #{tpu_custom_call.1} parent=1 // pred_check_branch
      %927 = sbr.rel (0) target = $region45
    $region44: #{tpu_custom_call.1} parent=1 // pred_region
      %s929 = ssub.s32 16, 16
      %930 = vsyncadd [#allocation6], %s929
      %933 = dma.smem_to_hbm [#allocation12], 16, %s6, [#allocation6]
    $region45: #{tpu_custom_call.1} parent=1 // pred_fallthru
      _
    // Predicated region
    $region46: #{tpu_custom_call.1} parent=1 // pred_check
      _
    $region47: #{tpu_custom_call.1} parent=1 // pred_check_branch
      %935 = sbr.rel (0) target = $region49
    $region48: #{tpu_custom_call.1} parent=1 // pred_region
      %s937 = ssub.s32 16, 16
      %938 = vsyncadd [#allocation14], %s937
      %s940 = sshll.u32 [#allocation13], 4
      %s941 = int_to_ptr.vmem [resolvable:$true] %s940
      %943 = dma.vmem_to_hbm [thread:$0]  %s941, 16, %s7, [#allocation14]
    $region49: #{tpu_custom_call.1} parent=1 // pred_fallthru
      _
    // Predicated region
    $region50: #{tpu_custom_call.1} parent=1 // pred_check
      _
    $region51: #{tpu_custom_call.1} parent=1 // pred_check_branch
      %945 = sbr.rel (0) target = $region53
    $region52: #{tpu_custom_call.1} parent=1 // pred_region
      %946 = dma.done [#allocation4], 128
    $region53: #{tpu_custom_call.1} parent=1 // pred_fallthru
      _
    // Predicated region
    $region54: #{tpu_custom_call.1} parent=1 // pred_check
      _
    $region55: #{tpu_custom_call.1} parent=1 // pred_check_branch
      %948 = sbr.rel (0) target = $region57
    $region56: #{tpu_custom_call.1} parent=1 // pred_region
      %949 = dma.done [#allocation6], 16
    $region57: #{tpu_custom_call.1} parent=1 // pred_fallthru
      _
    // Predicated region
    $region58: #{tpu_custom_call.1} parent=1 // pred_check
      _
    $region59: #{tpu_custom_call.1} parent=1 // pred_check_branch
      %951 = sbr.rel (0) target = $region61
    $region60: #{tpu_custom_call.1} parent=1 // pred_region
      %952 = dma.done [#allocation14], 16
    $region61: #{tpu_custom_call.1} parent=1 // pred_fallthru
      _
    %953 = sfence
    %954 = vsyncpa [#allocation3], 1
    %955 = vsyncpa [#allocation9], 1
    %956 = vsyncpa [#allocation4], 1
    %957 = vsyncpa [#allocation14], 1
    %958 = vsyncpa [#allocation5], 1
    %959 = vsyncpa [#allocation6], 1

</llo_original>
